<compile_context>
chip_gen: v7x
topology: tpu7x:2x2x1
jax: 0.10.0
libtpu: 0.0.40
codegen_flags: <defaults>
</compile_context>

<pallas_src>
import functools

import jax
import jax.numpy as jnp
from jax.experimental import pallas as pl
from jax.experimental.pallas import tpu as pltpu


def _round_up(x, m):
    return (x + m - 1) // m * m


def _tpu_kind():
    try:
        return jax.devices()[0].device_kind.lower()
    except Exception:
        return ""


def _resolve_dtypes(compute_dtype):
    """Pick (MXU dtype, elementwise roll/mask dtype) per TPU generation."""
    kind = _tpu_kind()
    new_gen = ("v6" in kind) or ("v7" in kind)
    if compute_dtype is None:
        compute_dtype = jnp.bfloat16 if new_gen else jnp.float32
    compute_dtype = jnp.dtype(compute_dtype)
    if compute_dtype == jnp.dtype(jnp.bfloat16) and not new_gen:
        # v5e and older: no bf16 VALU -> keep roll+mask in f32, cast at the dot.
        elem_dtype = jnp.dtype(jnp.float32)
    else:
        elem_dtype = compute_dtype
    return compute_dtype, elem_dtype


def _choose_batch_tile(N, max_tile=8):
    """Largest divisor of N (<= max_tile), preferring a grid that is even and
    >= 2 so both v7x TensorCores get balanced work."""
    divs = [d for d in range(1, min(N, max_tile) + 1) if N % d == 0]
    for d in sorted(divs, reverse=True):
        g = N // d
        if g >= 2 and g % 2 == 0:
            return d
    for d in sorted(divs, reverse=True):
        if N // d >= 2:
            return d
    return max(divs)


def _vmem_limit_bytes(per_step_bytes):
    cap = 128 * 1024 * 1024
    try:
        cap = int(pltpu.get_tpu_info().vmem_capacity_bytes)
    except Exception:
        pass
    want = max(32 * 1024 * 1024, 3 * per_step_bytes)
    return int(min(want, (cap * 3) // 4))


def _make_tap_masks(H, W):
    """(9, H*W) 0/1 masks: tap (dy, dx) is valid where the shifted source pixel
    lies inside the image (implements the padding=1 zero halo).  Tap order is
    dy*3 + dx, matching the xcol / weight packing."""
    idx = jnp.arange(H * W, dtype=jnp.int32)
    h = idx // W
    w = idx % W
    rows = []
    for dy in range(3):
        for dx in range(3):
            hv = h + (dy - 1)
            wv = w + (dx - 1)
            rows.append((hv >= 0) & (hv < H) & (wv >= 0) & (wv < W))
    return jnp.stack(rows, axis=0).astype(jnp.float32)  # (9, H*W)


def _pack_conv_weight(w_oihw, cin_pad, cout_pad):
    """PyTorch (Cout, Cin, 3, 3) -> (cout_pad, 9*cin_pad).
    Column = tap*cin_pad + ci (tap = dy*3 + dx); padded in/out channels are 0."""
    cout, cin, kh, kw = w_oihw.shape
    w = jnp.transpose(w_oihw, (0, 2, 3, 1))  # (Cout, 3, 3, Cin)
    if cin_pad != cin:
        w = jnp.pad(w, ((0, 0), (0, 0), (0, 0), (0, cin_pad - cin)))
    w = w.reshape(cout, kh * kw * cin_pad)
    if cout_pad != cout:
        w = jnp.pad(w, ((0, cout_pad - cout), (0, 0)))
    return w


def _pack_bias(b, cout_pad):
    cout = b.shape[0]
    b = b.astype(jnp.float32)
    if cout_pad != cout:
        b = jnp.pad(b, ((0, cout_pad - cout),))
    return b.reshape(cout_pad, 1)


def _conv3x3_layer(x, mask_full, wmat, bvec, W, HW, negative_slope, dot_dtype):
    """conv3x3(pad=1)+LeakyReLU on a flattened image.

    x:         (C, HW)        activation (any float dtype)
    mask_full: (9*C, HW)      0/1 halo mask, elementwise dtype
    wmat:      (Cout_pad, 9*C) packed weights, dot_dtype
    bvec:      (Cout_pad, 1)  bias, float32
    returns float32 (Cout_pad, HW), lane-dense.
    """
    x = x.astype(mask_full.dtype)  # elementwise (roll + mask) dtype
    pieces = []
    for dy in range(3):
        for dx in range(3):
            # shifted[p] = x[p + (dy-1)*W + (dx-1)] (circular); anything that
            # wrapped across the image border is zeroed by mask_full -> pad=1.
            off = (dy - 1) * W + (dx - 1)
            shift = (-off) % HW
            pieces.append(x if shift == 0 else pltpu.roll(x, shift, axis=1))
    # Tile-aligned placement (C is a sublane-tile multiple), then ONE mask mul.
    xcol = jnp.concatenate(pieces, axis=0) * mask_full        # (9*C, HW)
    acc = jnp.dot(wmat, xcol.astype(dot_dtype),
                  preferred_element_type=jnp.float32)         # (Cout_pad, HW)
    acc = acc + bvec
    return jnp.where(acc >= 0, acc, negative_slope * acc)


def _make_conv_lr_kernel(W, HW, depth, Btile, negative_slope, dot_dtype):
    def kernel(*refs):
        # refs = (x, mask1, w1, b1, [mask2, w2, b2,] out)
        x_ref = refs[0]
        m1 = refs[1][...]
        w1 = refs[2][...]
        b1 = refs[3][...]
        if depth > 1:
            m2 = refs[4][...]
            w2 = refs[5][...]
            b2 = refs[6][...]
        o_ref = refs[-1]
        # Btile images per grid step: amortizes per-step pipeline overhead and
        # keeps the MXU fed back-to-back.  Per-image working set stays tiny.
        for b in range(Btile):
            y = _conv3x3_layer(x_ref[b], m1, w1, b1, W, HW, negative_slope,
                               dot_dtype)
            if depth > 1:
                # Same conv2 weights for every extra layer, like PyTorch.
                for _ in range(depth - 1):
                    y = _conv3x3_layer(y, m2, w2, b2, W, HW, negative_slope,
                                       dot_dtype)
            o_ref[b] = y.astype(o_ref.dtype)

    return kernel


def conv_lr_forward(x_nchw, params, depth, *, negative_slope=0.1,
                    compute_dtype=None, batch_tile=None):
    """Conv_LR.forward.  x_nchw: (N, Cin, H, W) -> (N, Cout, H, W)."""
    N, Cin, H, W = x_nchw.shape
    HW = H * W
    cout = params["b1"].shape[0]
    out_dtype = x_nchw.dtype

    compute_dtype, elem_dtype = _resolve_dtypes(compute_dtype)
    sublane = 8 if jnp.dtype(elem_dtype).itemsize == 4 else 16
    cin_pad = _round_up(Cin, sublane)
    cout_pad = _round_up(cout, sublane)

    Btile = batch_tile if batch_tile is not None else _choose_batch_tile(N)
    assert N % Btile == 0, (N, Btile)
    G = N // Btile

    # NCHW-flat activation; pad channels to a full sublane tile (zeros).
    x = x_nchw.reshape(N, Cin, HW)
    if cin_pad != Cin:
        x = jnp.pad(x, ((0, 0), (0, cin_pad - Cin), (0, 0)))
    x = x.astype(elem_dtype)

    masks9 = _make_tap_masks(H, W)  # (9, HW)
    # Pre-broadcast to full im2col height -> one multiply per layer in-kernel.
    mask1 = jnp.repeat(masks9, cin_pad, axis=0).astype(elem_dtype)     # (9*cin_pad, HW)
    w1 = _pack_conv_weight(params["w1"], cin_pad, cout_pad).astype(compute_dtype)
    b1 = _pack_bias(params["b1"], cout_pad)

    inputs = [x, mask1, w1, b1]
    in_specs = [
        pl.BlockSpec((Btile, cin_pad, HW), lambda g: (g, 0, 0)),
        pl.BlockSpec((9 * cin_pad, HW), lambda g: (0, 0)),
        pl.BlockSpec((cout_pad, 9 * cin_pad), lambda g: (0, 0)),
        pl.BlockSpec((cout_pad, 1), lambda g: (0, 0)),
    ]
    if depth > 1:
        mask2 = jnp.repeat(masks9, cout_pad, axis=0).astype(elem_dtype)  # (9*cout_pad, HW)
        w2 = _pack_conv_weight(params["w2"], cout_pad, cout_pad).astype(compute_dtype)
        b2 = _pack_bias(params["b2"], cout_pad)
        inputs += [mask2, w2, b2]
        in_specs += [
            pl.BlockSpec((9 * cout_pad, HW), lambda g: (0, 0)),
            pl.BlockSpec((cout_pad, 9 * cout_pad), lambda g: (0, 0)),
            pl.BlockSpec((cout_pad, 1), lambda g: (0, 0)),
        ]

    # VMEM budget derived from the real blocks + in-kernel working set.
    esize = jnp.dtype(elem_dtype).itemsize
    csize = jnp.dtype(compute_dtype).itemsize
    osize = jnp.dtype(out_dtype).itemsize
    cmax = max(cin_pad, cout_pad)
    blocks = (Btile * cin_pad * HW * esize + Btile * cout_pad * HW * osize
              + 9 * cin_pad * HW * esize + cout_pad * 9 * cin_pad * csize
              + cout_pad * 4)
    if depth > 1:
        blocks += (9 * cout_pad * HW * esize
                   + cout_pad * 9 * cout_pad * csize + cout_pad * 4)
    working = 3 * 9 * cmax * HW * max(esize, csize) + 2 * cout_pad * HW * 4
    per_step = 2 * blocks + working  # x2: double-buffered pipeline

    kernel = _make_conv_lr_kernel(W=W, HW=HW, depth=depth, Btile=Btile,
                                  negative_slope=negative_slope,
                                  dot_dtype=compute_dtype)

    out = pl.pallas_call(
        kernel,
        out_shape=jax.ShapeDtypeStruct((N, cout_pad, HW), out_dtype),
        grid_spec=pltpu.PrefetchScalarGridSpec(
            num_scalar_prefetch=0,
            grid=(G,),
            in_specs=in_specs,
            out_specs=pl.BlockSpec((Btile, cout_pad, HW), lambda g: (g, 0, 0)),
        ),
        compiler_params=pltpu.CompilerParams(
            dimension_semantics=("parallel",),
            vmem_limit_bytes=_vmem_limit_bytes(per_step),
        ),
    )(*inputs)
    # Drop padded output channels and restore NCHW.
    return out[:, :cout, :].reshape(N, cout, H, W)


def init_conv_lr_params(key, in_ch, out_ch, depth):
    """PyTorch-default Conv2d init (uniform +/- 1/sqrt(fan_in)), OIHW layout."""
    params = {}
    k1, k2, k3, k4 = jax.random.split(key, 4)
    bound1 = 1.0 / (in_ch * 9) ** 0.5
    params["w1"] = jax.random.uniform(
        k1, (out_ch, in_ch, 3, 3), jnp.float32, -bound1, bound1)
    params["b1"] = jax.random.uniform(k2, (out_ch,), jnp.float32, -bound1, bound1)
    if depth > 1:
        bound2 = 1.0 / (out_ch * 9) ** 0.5
        params["w2"] = jax.random.uniform(
            k3, (out_ch, out_ch, 3, 3), jnp.float32, -bound2, bound2)
        params["b2"] = jax.random.uniform(k4, (out_ch,), jnp.float32, -bound2, bound2)
    return params


def _reference_forward(x, params, depth, negative_slope=0.1):
    """Pure-JAX reference (matches the PyTorch module)."""
    def layer(z, w, b):
        z = jax.lax.conv_general_dilated(
            z, w, window_strides=(1, 1), padding=((1, 1), (1, 1)),
            dimension_numbers=("NCHW", "OIHW", "NCHW"),
            precision=jax.lax.Precision.HIGHEST)
        z = z + b[None, :, None, None]
        return jnp.where(z >= 0, z, negative_slope * z)

    y = layer(x, params["w1"], params["b1"])
    for _ in range(depth - 1):
        y = layer(y, params["w2"], params["b2"])
    return y


if __name__ == "__main__":
    key = jax.random.PRNGKey(0)
    kx, kp = jax.random.split(key)

    # Small shapes; N=8 exercises Btile=4 image-batching with an even grid of 2.
    N, Cin, Cout, H, W = 8, 4, 8, 16, 16
    depth = 2  # exercises both conv1 and the repeated conv2 path

    x = jax.random.normal(kx, (N, Cin, H, W), jnp.float32)
    params = init_conv_lr_params(kp, Cin, Cout, depth)
    ref = _reference_forward(x, params, depth)

    # 1) f32 path (matches PyTorch numerics) -- tight tolerance.
    fwd32 = jax.jit(functools.partial(conv_lr_forward, depth=depth,
                                      compute_dtype=jnp.float32))
    out32 = jax.block_until_ready(fwd32(x, params))
    assert out32.shape == (N, Cout, H, W), out32.shape
    err32 = float(jnp.max(jnp.abs(out32 - ref)))
    assert err32 < 1e-3, f"f32 max |kernel - reference| = {err32}"

    # 2) Generation-default dtype (bf16 on v6e/v7x; f32 elsewhere).
    #    NOTE: in bf16 the intermediate activation is re-quantized each extra
    #    depth layer, so it diverges slightly from PyTorch f32 as depth grows.
    fwd_auto = jax.jit(functools.partial(conv_lr_forward, depth=depth))
    out_auto = jax.block_until_ready(fwd_auto(x, params))
    assert out_auto.shape == (N, Cout, H, W), out_auto.shape
    err_auto = float(jnp.max(jnp.abs(out_auto.astype(jnp.float32) - ref)))
    assert err_auto < 1e-1, f"auto-dtype max |kernel - reference| = {err_auto}"

    print("KERNEL_OK")
</pallas_src>

<mosaic_0001>
module attributes {stable_mosaic.version = 11 : i64} {
  func.func @kernel(%arg0: i32, %arg1: memref<4x8x256xf32, #tpu.memory_space<vmem>>, %arg2: memref<72x256xf32, #tpu.memory_space<vmem>>, %arg3: memref<8x72xf32, #tpu.memory_space<vmem>>, %arg4: memref<8x1xf32, #tpu.memory_space<vmem>>, %arg5: memref<72x256xf32, #tpu.memory_space<vmem>>, %arg6: memref<8x72xf32, #tpu.memory_space<vmem>>, %arg7: memref<8x1xf32, #tpu.memory_space<vmem>>, %arg8: memref<4x8x256xf32, #tpu.memory_space<vmem>>) attributes {dimension_semantics = [#tpu.dimension_semantics<parallel>], iteration_bounds = array<i64: 2>, scalar_prefetch = 0 : i64, scratch_operands = 0 : i64, tpu.core_type = #tpu.core_type<tc>, window_params = [{transform_indices = @transform_0, window_bounds = array<i64: 4, 8, 256>}, {pipeline_mode = #tpu.pipeline_mode<synchronous>, transform_indices = @transform_1, window_bounds = array<i64: 72, 256>}, {pipeline_mode = #tpu.pipeline_mode<synchronous>, transform_indices = @transform_2, window_bounds = array<i64: 8, 72>}, {pipeline_mode = #tpu.pipeline_mode<synchronous>, transform_indices = @transform_3, window_bounds = array<i64: 8, 1>}, {pipeline_mode = #tpu.pipeline_mode<synchronous>, transform_indices = @transform_4, window_bounds = array<i64: 72, 256>}, {pipeline_mode = #tpu.pipeline_mode<synchronous>, transform_indices = @transform_5, window_bounds = array<i64: 8, 72>}, {pipeline_mode = #tpu.pipeline_mode<synchronous>, transform_indices = @transform_6, window_bounds = array<i64: 8, 1>}, {transform_indices = @transform_7, window_bounds = array<i64: 4, 8, 256>}]} {
    %c0 = arith.constant 0 : index
    %c0_0 = arith.constant 0 : index
    %0 = vector.load %arg2[%c0, %c0_0] : memref<72x256xf32, #tpu.memory_space<vmem>>, vector<72x256xf32>
    %c0_1 = arith.constant 0 : index
    %c0_2 = arith.constant 0 : index
    %1 = vector.load %arg3[%c0_1, %c0_2] : memref<8x72xf32, #tpu.memory_space<vmem>>, vector<8x72xf32>
    %c0_3 = arith.constant 0 : index
    %c0_4 = arith.constant 0 : index
    %2 = vector.load %arg4[%c0_3, %c0_4] : memref<8x1xf32, #tpu.memory_space<vmem>>, vector<8x1xf32>
    %c0_5 = arith.constant 0 : index
    %c0_6 = arith.constant 0 : index
    %3 = vector.load %arg5[%c0_5, %c0_6] : memref<72x256xf32, #tpu.memory_space<vmem>>, vector<72x256xf32>
    %c0_7 = arith.constant 0 : index
    %c0_8 = arith.constant 0 : index
    %4 = vector.load %arg6[%c0_7, %c0_8] : memref<8x72xf32, #tpu.memory_space<vmem>>, vector<8x72xf32>
    %c0_9 = arith.constant 0 : index
    %c0_10 = arith.constant 0 : index
    %5 = vector.load %arg7[%c0_9, %c0_10] : memref<8x1xf32, #tpu.memory_space<vmem>>, vector<8x1xf32>
    %c0_11 = arith.constant 0 : index
    %c0_12 = arith.constant 0 : index
    %c0_13 = arith.constant 0 : index
    %6 = vector.load %arg1[%c0_11, %c0_12, %c0_13] : memref<4x8x256xf32, #tpu.memory_space<vmem>>, vector<1x8x256xf32>
    %7 = vector.shape_cast %6 : vector<1x8x256xf32> to vector<8x256xf32>
    %c17_i32 = arith.constant 17 : i32
    %8 = tpu.dynamic_rotate %7 by %c17_i32 dim 1 : vector<8x256xf32>, i32 -> vector<8x256xf32>
    %c16_i32 = arith.constant 16 : i32
    %9 = tpu.dynamic_rotate %7 by %c16_i32 dim 1 : vector<8x256xf32>, i32 -> vector<8x256xf32>
    %c15_i32 = arith.constant 15 : i32
    %10 = tpu.dynamic_rotate %7 by %c15_i32 dim 1 : vector<8x256xf32>, i32 -> vector<8x256xf32>
    %c1_i32 = arith.constant 1 : i32
    %11 = tpu.dynamic_rotate %7 by %c1_i32 dim 1 : vector<8x256xf32>, i32 -> vector<8x256xf32>
    %c255_i32 = arith.constant 255 : i32
    %12 = tpu.dynamic_rotate %7 by %c255_i32 dim 1 : vector<8x256xf32>, i32 -> vector<8x256xf32>
    %c241_i32 = arith.constant 241 : i32
    %13 = tpu.dynamic_rotate %7 by %c241_i32 dim 1 : vector<8x256xf32>, i32 -> vector<8x256xf32>
    %c240_i32 = arith.constant 240 : i32
    %14 = tpu.dynamic_rotate %7 by %c240_i32 dim 1 : vector<8x256xf32>, i32 -> vector<8x256xf32>
    %c239_i32 = arith.constant 239 : i32
    %15 = tpu.dynamic_rotate %7 by %c239_i32 dim 1 : vector<8x256xf32>, i32 -> vector<8x256xf32>
    %16 = tpu.concatenate %8, %9, %10, %11, %7, %12, %13, %14, %15 in 0 : vector<8x256xf32>, vector<8x256xf32>, vector<8x256xf32>, vector<8x256xf32>, vector<8x256xf32>, vector<8x256xf32>, vector<8x256xf32>, vector<8x256xf32>, vector<8x256xf32> -> vector<72x256xf32>
    %17 = arith.mulf %16, %0 : vector<72x256xf32>
    %cst = arith.constant dense<0.000000e+00> : vector<8x256xf32>
    %18 = tpu.matmul %1, %17, %cst {dimension_numbers = #tpu.dot_dimension_numbers<[1], [0], [0], [1], [0, 0, 1, 1], [], []>} : vector<8x72xf32>, vector<72x256xf32>, vector<8x256xf32> -> vector<8x256xf32>
    %19 = vector.broadcast %2 : vector<8x1xf32> to vector<8x256xf32>
    %20 = arith.addf %18, %19 : vector<8x256xf32>
    %cst_14 = arith.constant 0.000000e+00 : f32
    %21 = vector.broadcast %cst_14 : f32 to vector<8x256xf32>
    %22 = arith.cmpf oge, %20, %21 : vector<8x256xf32>
    %cst_15 = arith.constant 1.000000e-01 : f32
    %23 = vector.broadcast %cst_15 : f32 to vector<8x256xf32>
    %24 = arith.mulf %23, %20 : vector<8x256xf32>
    %25 = arith.select %22, %20, %24 : vector<8x256xi1>, vector<8x256xf32>
    %c17_i32_16 = arith.constant 17 : i32
    %26 = tpu.dynamic_rotate %25 by %c17_i32_16 dim 1 : vector<8x256xf32>, i32 -> vector<8x256xf32>
    %c16_i32_17 = arith.constant 16 : i32
    %27 = tpu.dynamic_rotate %25 by %c16_i32_17 dim 1 : vector<8x256xf32>, i32 -> vector<8x256xf32>
    %c15_i32_18 = arith.constant 15 : i32
    %28 = tpu.dynamic_rotate %25 by %c15_i32_18 dim 1 : vector<8x256xf32>, i32 -> vector<8x256xf32>
    %c1_i32_19 = arith.constant 1 : i32
    %29 = tpu.dynamic_rotate %25 by %c1_i32_19 dim 1 : vector<8x256xf32>, i32 -> vector<8x256xf32>
    %c255_i32_20 = arith.constant 255 : i32
    %30 = tpu.dynamic_rotate %25 by %c255_i32_20 dim 1 : vector<8x256xf32>, i32 -> vector<8x256xf32>
    %c241_i32_21 = arith.constant 241 : i32
    %31 = tpu.dynamic_rotate %25 by %c241_i32_21 dim 1 : vector<8x256xf32>, i32 -> vector<8x256xf32>
    %c240_i32_22 = arith.constant 240 : i32
    %32 = tpu.dynamic_rotate %25 by %c240_i32_22 dim 1 : vector<8x256xf32>, i32 -> vector<8x256xf32>
    %c239_i32_23 = arith.constant 239 : i32
    %33 = tpu.dynamic_rotate %25 by %c239_i32_23 dim 1 : vector<8x256xf32>, i32 -> vector<8x256xf32>
    %34 = tpu.concatenate %26, %27, %28, %29, %25, %30, %31, %32, %33 in 0 : vector<8x256xf32>, vector<8x256xf32>, vector<8x256xf32>, vector<8x256xf32>, vector<8x256xf32>, vector<8x256xf32>, vector<8x256xf32>, vector<8x256xf32>, vector<8x256xf32> -> vector<72x256xf32>
    %35 = arith.mulf %34, %3 : vector<72x256xf32>
    %cst_24 = arith.constant dense<0.000000e+00> : vector<8x256xf32>
    %36 = tpu.matmul %4, %35, %cst_24 {dimension_numbers = #tpu.dot_dimension_numbers<[1], [0], [0], [1], [0, 0, 1, 1], [], []>} : vector<8x72xf32>, vector<72x256xf32>, vector<8x256xf32> -> vector<8x256xf32>
    %37 = vector.broadcast %5 : vector<8x1xf32> to vector<8x256xf32>
    %38 = arith.addf %36, %37 : vector<8x256xf32>
    %cst_25 = arith.constant 0.000000e+00 : f32
    %39 = vector.broadcast %cst_25 : f32 to vector<8x256xf32>
    %40 = arith.cmpf oge, %38, %39 : vector<8x256xf32>
    %cst_26 = arith.constant 1.000000e-01 : f32
    %41 = vector.broadcast %cst_26 : f32 to vector<8x256xf32>
    %42 = arith.mulf %41, %38 : vector<8x256xf32>
    %43 = arith.select %40, %38, %42 : vector<8x256xi1>, vector<8x256xf32>
    %c0_27 = arith.constant 0 : index
    %c0_28 = arith.constant 0 : index
    %c0_29 = arith.constant 0 : index
    %44 = vector.load %arg8[%c0_27, %c0_28, %c0_29] : memref<4x8x256xf32, #tpu.memory_space<vmem>>, vector<1x8x256xf32>
    %45 = vector.shape_cast %44 : vector<1x8x256xf32> to vector<8x256xf32>
    %46 = vector.shape_cast %43 : vector<8x256xf32> to vector<1x8x256xf32>
    tpu.vector_store %arg8[%c0_27, %c0_28, %c0_29], %46 {strides = array<i32>} : memref<4x8x256xf32, #tpu.memory_space<vmem>>, vector<1x8x256xf32>,
    %c1 = arith.constant 1 : index
    %c0_30 = arith.constant 0 : index
    %c0_31 = arith.constant 0 : index
    %47 = vector.load %arg1[%c1, %c0_30, %c0_31] : memref<4x8x256xf32, #tpu.memory_space<vmem>>, vector<1x8x256xf32>
    %48 = vector.shape_cast %47 : vector<1x8x256xf32> to vector<8x256xf32>
    %c17_i32_32 = arith.constant 17 : i32
    %49 = tpu.dynamic_rotate %48 by %c17_i32_32 dim 1 : vector<8x256xf32>, i32 -> vector<8x256xf32>
    %c16_i32_33 = arith.constant 16 : i32
    %50 = tpu.dynamic_rotate %48 by %c16_i32_33 dim 1 : vector<8x256xf32>, i32 -> vector<8x256xf32>
    %c15_i32_34 = arith.constant 15 : i32
    %51 = tpu.dynamic_rotate %48 by %c15_i32_34 dim 1 : vector<8x256xf32>, i32 -> vector<8x256xf32>
    %c1_i32_35 = arith.constant 1 : i32
    %52 = tpu.dynamic_rotate %48 by %c1_i32_35 dim 1 : vector<8x256xf32>, i32 -> vector<8x256xf32>
    %c255_i32_36 = arith.constant 255 : i32
    %53 = tpu.dynamic_rotate %48 by %c255_i32_36 dim 1 : vector<8x256xf32>, i32 -> vector<8x256xf32>
    %c241_i32_37 = arith.constant 241 : i32
    %54 = tpu.dynamic_rotate %48 by %c241_i32_37 dim 1 : vector<8x256xf32>, i32 -> vector<8x256xf32>
    %c240_i32_38 = arith.constant 240 : i32
    %55 = tpu.dynamic_rotate %48 by %c240_i32_38 dim 1 : vector<8x256xf32>, i32 -> vector<8x256xf32>
    %c239_i32_39 = arith.constant 239 : i32
    %56 = tpu.dynamic_rotate %48 by %c239_i32_39 dim 1 : vector<8x256xf32>, i32 -> vector<8x256xf32>
    %57 = tpu.concatenate %49, %50, %51, %52, %48, %53, %54, %55, %56 in 0 : vector<8x256xf32>, vector<8x256xf32>, vector<8x256xf32>, vector<8x256xf32>, vector<8x256xf32>, vector<8x256xf32>, vector<8x256xf32>, vector<8x256xf32>, vector<8x256xf32> -> vector<72x256xf32>
    %58 = arith.mulf %57, %0 : vector<72x256xf32>
    %cst_40 = arith.constant dense<0.000000e+00> : vector<8x256xf32>
    %59 = tpu.matmul %1, %58, %cst_40 {dimension_numbers = #tpu.dot_dimension_numbers<[1], [0], [0], [1], [0, 0, 1, 1], [], []>} : vector<8x72xf32>, vector<72x256xf32>, vector<8x256xf32> -> vector<8x256xf32>
    %60 = vector.broadcast %2 : vector<8x1xf32> to vector<8x256xf32>
    %61 = arith.addf %59, %60 : vector<8x256xf32>
    %cst_41 = arith.constant 0.000000e+00 : f32
    %62 = vector.broadcast %cst_41 : f32 to vector<8x256xf32>
    %63 = arith.cmpf oge, %61, %62 : vector<8x256xf32>
    %cst_42 = arith.constant 1.000000e-01 : f32
    %64 = vector.broadcast %cst_42 : f32 to vector<8x256xf32>
    %65 = arith.mulf %64, %61 : vector<8x256xf32>
    %66 = arith.select %63, %61, %65 : vector<8x256xi1>, vector<8x256xf32>
    %c17_i32_43 = arith.constant 17 : i32
    %67 = tpu.dynamic_rotate %66 by %c17_i32_43 dim 1 : vector<8x256xf32>, i32 -> vector<8x256xf32>
    %c16_i32_44 = arith.constant 16 : i32
    %68 = tpu.dynamic_rotate %66 by %c16_i32_44 dim 1 : vector<8x256xf32>, i32 -> vector<8x256xf32>
    %c15_i32_45 = arith.constant 15 : i32
    %69 = tpu.dynamic_rotate %66 by %c15_i32_45 dim 1 : vector<8x256xf32>, i32 -> vector<8x256xf32>
    %c1_i32_46 = arith.constant 1 : i32
    %70 = tpu.dynamic_rotate %66 by %c1_i32_46 dim 1 : vector<8x256xf32>, i32 -> vector<8x256xf32>
    %c255_i32_47 = arith.constant 255 : i32
    %71 = tpu.dynamic_rotate %66 by %c255_i32_47 dim 1 : vector<8x256xf32>, i32 -> vector<8x256xf32>
    %c241_i32_48 = arith.constant 241 : i32
    %72 = tpu.dynamic_rotate %66 by %c241_i32_48 dim 1 : vector<8x256xf32>, i32 -> vector<8x256xf32>
    %c240_i32_49 = arith.constant 240 : i32
    %73 = tpu.dynamic_rotate %66 by %c240_i32_49 dim 1 : vector<8x256xf32>, i32 -> vector<8x256xf32>
    %c239_i32_50 = arith.constant 239 : i32
    %74 = tpu.dynamic_rotate %66 by %c239_i32_50 dim 1 : vector<8x256xf32>, i32 -> vector<8x256xf32>
    %75 = tpu.concatenate %67, %68, %69, %70, %66, %71, %72, %73, %74 in 0 : vector<8x256xf32>, vector<8x256xf32>, vector<8x256xf32>, vector<8x256xf32>, vector<8x256xf32>, vector<8x256xf32>, vector<8x256xf32>, vector<8x256xf32>, vector<8x256xf32> -> vector<72x256xf32>
    %76 = arith.mulf %75, %3 : vector<72x256xf32>
    %cst_51 = arith.constant dense<0.000000e+00> : vector<8x256xf32>
    %77 = tpu.matmul %4, %76, %cst_51 {dimension_numbers = #tpu.dot_dimension_numbers<[1], [0], [0], [1], [0, 0, 1, 1], [], []>} : vector<8x72xf32>, vector<72x256xf32>, vector<8x256xf32> -> vector<8x256xf32>
    %78 = vector.broadcast %5 : vector<8x1xf32> to vector<8x256xf32>
    %79 = arith.addf %77, %78 : vector<8x256xf32>
    %cst_52 = arith.constant 0.000000e+00 : f32
    %80 = vector.broadcast %cst_52 : f32 to vector<8x256xf32>
    %81 = arith.cmpf oge, %79, %80 : vector<8x256xf32>
    %cst_53 = arith.constant 1.000000e-01 : f32
    %82 = vector.broadcast %cst_53 : f32 to vector<8x256xf32>
    %83 = arith.mulf %82, %79 : vector<8x256xf32>
    %84 = arith.select %81, %79, %83 : vector<8x256xi1>, vector<8x256xf32>
    %c1_54 = arith.constant 1 : index
    %c0_55 = arith.constant 0 : index
    %c0_56 = arith.constant 0 : index
    %85 = vector.load %arg8[%c1_54, %c0_55, %c0_56] : memref<4x8x256xf32, #tpu.memory_space<vmem>>, vector<1x8x256xf32>
    %86 = vector.shape_cast %85 : vector<1x8x256xf32> to vector<8x256xf32>
    %87 = vector.shape_cast %84 : vector<8x256xf32> to vector<1x8x256xf32>
    tpu.vector_store %arg8[%c1_54, %c0_55, %c0_56], %87 {strides = array<i32>} : memref<4x8x256xf32, #tpu.memory_space<vmem>>, vector<1x8x256xf32>,
    %c2 = arith.constant 2 : index
    %c0_57 = arith.constant 0 : index
    %c0_58 = arith.constant 0 : index
    %88 = vector.load %arg1[%c2, %c0_57, %c0_58] : memref<4x8x256xf32, #tpu.memory_space<vmem>>, vector<1x8x256xf32>
    %89 = vector.shape_cast %88 : vector<1x8x256xf32> to vector<8x256xf32>
    %c17_i32_59 = arith.constant 17 : i32
    %90 = tpu.dynamic_rotate %89 by %c17_i32_59 dim 1 : vector<8x256xf32>, i32 -> vector<8x256xf32>
    %c16_i32_60 = arith.constant 16 : i32
    %91 = tpu.dynamic_rotate %89 by %c16_i32_60 dim 1 : vector<8x256xf32>, i32 -> vector<8x256xf32>
    %c15_i32_61 = arith.constant 15 : i32
    %92 = tpu.dynamic_rotate %89 by %c15_i32_61 dim 1 : vector<8x256xf32>, i32 -> vector<8x256xf32>
    %c1_i32_62 = arith.constant 1 : i32
    %93 = tpu.dynamic_rotate %89 by %c1_i32_62 dim 1 : vector<8x256xf32>, i32 -> vector<8x256xf32>
    %c255_i32_63 = arith.constant 255 : i32
    %94 = tpu.dynamic_rotate %89 by %c255_i32_63 dim 1 : vector<8x256xf32>, i32 -> vector<8x256xf32>
    %c241_i32_64 = arith.constant 241 : i32
    %95 = tpu.dynamic_rotate %89 by %c241_i32_64 dim 1 : vector<8x256xf32>, i32 -> vector<8x256xf32>
    %c240_i32_65 = arith.constant 240 : i32
    %96 = tpu.dynamic_rotate %89 by %c240_i32_65 dim 1 : vector<8x256xf32>, i32 -> vector<8x256xf32>
    %c239_i32_66 = arith.constant 239 : i32
    %97 = tpu.dynamic_rotate %89 by %c239_i32_66 dim 1 : vector<8x256xf32>, i32 -> vector<8x256xf32>
    %98 = tpu.concatenate %90, %91, %92, %93, %89, %94, %95, %96, %97 in 0 : vector<8x256xf32>, vector<8x256xf32>, vector<8x256xf32>, vector<8x256xf32>, vector<8x256xf32>, vector<8x256xf32>, vector<8x256xf32>, vector<8x256xf32>, vector<8x256xf32> -> vector<72x256xf32>
    %99 = arith.mulf %98, %0 : vector<72x256xf32>
    %cst_67 = arith.constant dense<0.000000e+00> : vector<8x256xf32>
    %100 = tpu.matmul %1, %99, %cst_67 {dimension_numbers = #tpu.dot_dimension_numbers<[1], [0], [0], [1], [0, 0, 1, 1], [], []>} : vector<8x72xf32>, vector<72x256xf32>, vector<8x256xf32> -> vector<8x256xf32>
    %101 = vector.broadcast %2 : vector<8x1xf32> to vector<8x256xf32>
    %102 = arith.addf %100, %101 : vector<8x256xf32>
    %cst_68 = arith.constant 0.000000e+00 : f32
    %103 = vector.broadcast %cst_68 : f32 to vector<8x256xf32>
    %104 = arith.cmpf oge, %102, %103 : vector<8x256xf32>
    %cst_69 = arith.constant 1.000000e-01 : f32
    %105 = vector.broadcast %cst_69 : f32 to vector<8x256xf32>
    %106 = arith.mulf %105, %102 : vector<8x256xf32>
    %107 = arith.select %104, %102, %106 : vector<8x256xi1>, vector<8x256xf32>
    %c17_i32_70 = arith.constant 17 : i32
    %108 = tpu.dynamic_rotate %107 by %c17_i32_70 dim 1 : vector<8x256xf32>, i32 -> vector<8x256xf32>
    %c16_i32_71 = arith.constant 16 : i32
    %109 = tpu.dynamic_rotate %107 by %c16_i32_71 dim 1 : vector<8x256xf32>, i32 -> vector<8x256xf32>
    %c15_i32_72 = arith.constant 15 : i32
    %110 = tpu.dynamic_rotate %107 by %c15_i32_72 dim 1 : vector<8x256xf32>, i32 -> vector<8x256xf32>
    %c1_i32_73 = arith.constant 1 : i32
    %111 = tpu.dynamic_rotate %107 by %c1_i32_73 dim 1 : vector<8x256xf32>, i32 -> vector<8x256xf32>
    %c255_i32_74 = arith.constant 255 : i32
    %112 = tpu.dynamic_rotate %107 by %c255_i32_74 dim 1 : vector<8x256xf32>, i32 -> vector<8x256xf32>
    %c241_i32_75 = arith.constant 241 : i32
    %113 = tpu.dynamic_rotate %107 by %c241_i32_75 dim 1 : vector<8x256xf32>, i32 -> vector<8x256xf32>
    %c240_i32_76 = arith.constant 240 : i32
    %114 = tpu.dynamic_rotate %107 by %c240_i32_76 dim 1 : vector<8x256xf32>, i32 -> vector<8x256xf32>
    %c239_i32_77 = arith.constant 239 : i32
    %115 = tpu.dynamic_rotate %107 by %c239_i32_77 dim 1 : vector<8x256xf32>, i32 -> vector<8x256xf32>
    %116 = tpu.concatenate %108, %109, %110, %111, %107, %112, %113, %114, %115 in 0 : vector<8x256xf32>, vector<8x256xf32>, vector<8x256xf32>, vector<8x256xf32>, vector<8x256xf32>, vector<8x256xf32>, vector<8x256xf32>, vector<8x256xf32>, vector<8x256xf32> -> vector<72x256xf32>
    %117 = arith.mulf %116, %3 : vector<72x256xf32>
    %cst_78 = arith.constant dense<0.000000e+00> : vector<8x256xf32>
    %118 = tpu.matmul %4, %117, %cst_78 {dimension_numbers = #tpu.dot_dimension_numbers<[1], [0], [0], [1], [0, 0, 1, 1], [], []>} : vector<8x72xf32>, vector<72x256xf32>, vector<8x256xf32> -> vector<8x256xf32>
    %119 = vector.broadcast %5 : vector<8x1xf32> to vector<8x256xf32>
    %120 = arith.addf %118, %119 : vector<8x256xf32>
    %cst_79 = arith.constant 0.000000e+00 : f32
    %121 = vector.broadcast %cst_79 : f32 to vector<8x256xf32>
    %122 = arith.cmpf oge, %120, %121 : vector<8x256xf32>
    %cst_80 = arith.constant 1.000000e-01 : f32
    %123 = vector.broadcast %cst_80 : f32 to vector<8x256xf32>
    %124 = arith.mulf %123, %120 : vector<8x256xf32>
    %125 = arith.select %122, %120, %124 : vector<8x256xi1>, vector<8x256xf32>
    %c2_81 = arith.constant 2 : index
    %c0_82 = arith.constant 0 : index
    %c0_83 = arith.constant 0 : index
    %126 = vector.load %arg8[%c2_81, %c0_82, %c0_83] : memref<4x8x256xf32, #tpu.memory_space<vmem>>, vector<1x8x256xf32>
    %127 = vector.shape_cast %126 : vector<1x8x256xf32> to vector<8x256xf32>
    %128 = vector.shape_cast %125 : vector<8x256xf32> to vector<1x8x256xf32>
    tpu.vector_store %arg8[%c2_81, %c0_82, %c0_83], %128 {strides = array<i32>} : memref<4x8x256xf32, #tpu.memory_space<vmem>>, vector<1x8x256xf32>,
    %c3 = arith.constant 3 : index
    %c0_84 = arith.constant 0 : index
    %c0_85 = arith.constant 0 : index
    %129 = vector.load %arg1[%c3, %c0_84, %c0_85] : memref<4x8x256xf32, #tpu.memory_space<vmem>>, vector<1x8x256xf32>
    %130 = vector.shape_cast %129 : vector<1x8x256xf32> to vector<8x256xf32>
    %c17_i32_86 = arith.constant 17 : i32
    %131 = tpu.dynamic_rotate %130 by %c17_i32_86 dim 1 : vector<8x256xf32>, i32 -> vector<8x256xf32>
    %c16_i32_87 = arith.constant 16 : i32
    %132 = tpu.dynamic_rotate %130 by %c16_i32_87 dim 1 : vector<8x256xf32>, i32 -> vector<8x256xf32>
    %c15_i32_88 = arith.constant 15 : i32
    %133 = tpu.dynamic_rotate %130 by %c15_i32_88 dim 1 : vector<8x256xf32>, i32 -> vector<8x256xf32>
    %c1_i32_89 = arith.constant 1 : i32
    %134 = tpu.dynamic_rotate %130 by %c1_i32_89 dim 1 : vector<8x256xf32>, i32 -> vector<8x256xf32>
    %c255_i32_90 = arith.constant 255 : i32
    %135 = tpu.dynamic_rotate %130 by %c255_i32_90 dim 1 : vector<8x256xf32>, i32 -> vector<8x256xf32>
    %c241_i32_91 = arith.constant 241 : i32
    %136 = tpu.dynamic_rotate %130 by %c241_i32_91 dim 1 : vector<8x256xf32>, i32 -> vector<8x256xf32>
    %c240_i32_92 = arith.constant 240 : i32
    %137 = tpu.dynamic_rotate %130 by %c240_i32_92 dim 1 : vector<8x256xf32>, i32 -> vector<8x256xf32>
    %c239_i32_93 = arith.constant 239 : i32
    %138 = tpu.dynamic_rotate %130 by %c239_i32_93 dim 1 : vector<8x256xf32>, i32 -> vector<8x256xf32>
    %139 = tpu.concatenate %131, %132, %133, %134, %130, %135, %136, %137, %138 in 0 : vector<8x256xf32>, vector<8x256xf32>, vector<8x256xf32>, vector<8x256xf32>, vector<8x256xf32>, vector<8x256xf32>, vector<8x256xf32>, vector<8x256xf32>, vector<8x256xf32> -> vector<72x256xf32>
    %140 = arith.mulf %139, %0 : vector<72x256xf32>
    %cst_94 = arith.constant dense<0.000000e+00> : vector<8x256xf32>
    %141 = tpu.matmul %1, %140, %cst_94 {dimension_numbers = #tpu.dot_dimension_numbers<[1], [0], [0], [1], [0, 0, 1, 1], [], []>} : vector<8x72xf32>, vector<72x256xf32>, vector<8x256xf32> -> vector<8x256xf32>
    %142 = vector.broadcast %2 : vector<8x1xf32> to vector<8x256xf32>
    %143 = arith.addf %141, %142 : vector<8x256xf32>
    %cst_95 = arith.constant 0.000000e+00 : f32
    %144 = vector.broadcast %cst_95 : f32 to vector<8x256xf32>
    %145 = arith.cmpf oge, %143, %144 : vector<8x256xf32>
    %cst_96 = arith.constant 1.000000e-01 : f32
    %146 = vector.broadcast %cst_96 : f32 to vector<8x256xf32>
    %147 = arith.mulf %146, %143 : vector<8x256xf32>
    %148 = arith.select %145, %143, %147 : vector<8x256xi1>, vector<8x256xf32>
    %c17_i32_97 = arith.constant 17 : i32
    %149 = tpu.dynamic_rotate %148 by %c17_i32_97 dim 1 : vector<8x256xf32>, i32 -> vector<8x256xf32>
    %c16_i32_98 = arith.constant 16 : i32
    %150 = tpu.dynamic_rotate %148 by %c16_i32_98 dim 1 : vector<8x256xf32>, i32 -> vector<8x256xf32>
    %c15_i32_99 = arith.constant 15 : i32
    %151 = tpu.dynamic_rotate %148 by %c15_i32_99 dim 1 : vector<8x256xf32>, i32 -> vector<8x256xf32>
    %c1_i32_100 = arith.constant 1 : i32
    %152 = tpu.dynamic_rotate %148 by %c1_i32_100 dim 1 : vector<8x256xf32>, i32 -> vector<8x256xf32>
    %c255_i32_101 = arith.constant 255 : i32
    %153 = tpu.dynamic_rotate %148 by %c255_i32_101 dim 1 : vector<8x256xf32>, i32 -> vector<8x256xf32>
    %c241_i32_102 = arith.constant 241 : i32
    %154 = tpu.dynamic_rotate %148 by %c241_i32_102 dim 1 : vector<8x256xf32>, i32 -> vector<8x256xf32>
    %c240_i32_103 = arith.constant 240 : i32
    %155 = tpu.dynamic_rotate %148 by %c240_i32_103 dim 1 : vector<8x256xf32>, i32 -> vector<8x256xf32>
    %c239_i32_104 = arith.constant 239 : i32
    %156 = tpu.dynamic_rotate %148 by %c239_i32_104 dim 1 : vector<8x256xf32>, i32 -> vector<8x256xf32>
    %157 = tpu.concatenate %149, %150, %151, %152, %148, %153, %154, %155, %156 in 0 : vector<8x256xf32>, vector<8x256xf32>, vector<8x256xf32>, vector<8x256xf32>, vector<8x256xf32>, vector<8x256xf32>, vector<8x256xf32>, vector<8x256xf32>, vector<8x256xf32> -> vector<72x256xf32>
    %158 = arith.mulf %157, %3 : vector<72x256xf32>
    %cst_105 = arith.constant dense<0.000000e+00> : vector<8x256xf32>
    %159 = tpu.matmul %4, %158, %cst_105 {dimension_numbers = #tpu.dot_dimension_numbers<[1], [0], [0], [1], [0, 0, 1, 1], [], []>} : vector<8x72xf32>, vector<72x256xf32>, vector<8x256xf32> -> vector<8x256xf32>
    %160 = vector.broadcast %5 : vector<8x1xf32> to vector<8x256xf32>
    %161 = arith.addf %159, %160 : vector<8x256xf32>
    %cst_106 = arith.constant 0.000000e+00 : f32
    %162 = vector.broadcast %cst_106 : f32 to vector<8x256xf32>
    %163 = arith.cmpf oge, %161, %162 : vector<8x256xf32>
    %cst_107 = arith.constant 1.000000e-01 : f32
    %164 = vector.broadcast %cst_107 : f32 to vector<8x256xf32>
    %165 = arith.mulf %164, %161 : vector<8x256xf32>
    %166 = arith.select %163, %161, %165 : vector<8x256xi1>, vector<8x256xf32>
    %c3_108 = arith.constant 3 : index
    %c0_109 = arith.constant 0 : index
    %c0_110 = arith.constant 0 : index
    %167 = vector.load %arg8[%c3_108, %c0_109, %c0_110] : memref<4x8x256xf32, #tpu.memory_space<vmem>>, vector<1x8x256xf32>
    %168 = vector.shape_cast %167 : vector<1x8x256xf32> to vector<8x256xf32>
    %169 = vector.shape_cast %166 : vector<8x256xf32> to vector<1x8x256xf32>
    tpu.vector_store %arg8[%c3_108, %c0_109, %c0_110], %169 {strides = array<i32>} : memref<4x8x256xf32, #tpu.memory_space<vmem>>, vector<1x8x256xf32>,
    return
  }
  func.func @transform_0(%arg0: i32) -> (i32, i32, i32) {
    %c0_i32 = arith.constant 0 : i32
    %c0_i32_0 = arith.constant 0 : i32
    %c0_i32_1 = arith.constant 0 : i32
    return %arg0, %c0_i32, %c0_i32_0 : i32, i32, i32
  }
  func.func @transform_1(%arg0: i32) -> (i32, i32) {
    %c0_i32 = arith.constant 0 : i32
    %c0_i32_0 = arith.constant 0 : i32
    %c0_i32_1 = arith.constant 0 : i32
    return %c0_i32, %c0_i32_0 : i32, i32
  }
  func.func @transform_2(%arg0: i32) -> (i32, i32) {
    %c0_i32 = arith.constant 0 : i32
    %c0_i32_0 = arith.constant 0 : i32
    %c0_i32_1 = arith.constant 0 : i32
    return %c0_i32, %c0_i32_0 : i32, i32
  }
  func.func @transform_3(%arg0: i32) -> (i32, i32) {
    %c0_i32 = arith.constant 0 : i32
    %c0_i32_0 = arith.constant 0 : i32
    %c0_i32_1 = arith.constant 0 : i32
    return %c0_i32, %c0_i32_0 : i32, i32
  }
  func.func @transform_4(%arg0: i32) -> (i32, i32) {
    %c0_i32 = arith.constant 0 : i32
    %c0_i32_0 = arith.constant 0 : i32
    %c0_i32_1 = arith.constant 0 : i32
    return %c0_i32, %c0_i32_0 : i32, i32
  }
  func.func @transform_5(%arg0: i32) -> (i32, i32) {
    %c0_i32 = arith.constant 0 : i32
    %c0_i32_0 = arith.constant 0 : i32
    %c0_i32_1 = arith.constant 0 : i32
    return %c0_i32, %c0_i32_0 : i32, i32
  }
  func.func @transform_6(%arg0: i32) -> (i32, i32) {
    %c0_i32 = arith.constant 0 : i32
    %c0_i32_0 = arith.constant 0 : i32
    %c0_i32_1 = arith.constant 0 : i32
    return %c0_i32, %c0_i32_0 : i32, i32
  }
  func.func @transform_7(%arg0: i32) -> (i32, i32, i32) {
    %c0_i32 = arith.constant 0 : i32
    %c0_i32_0 = arith.constant 0 : i32
    %c0_i32_1 = arith.constant 0 : i32
    return %arg0, %c0_i32, %c0_i32_0 : i32, i32, i32
  }
}

</mosaic_0001>

<llo_original>
// kernel: conv_lr_forward.1
$region0: #{conv_lr_forward.1}
  #allocation0 [shape = 'u32[]', space=smem, size = 0x4, offset = 0x4, fixed_abs, tag = 'smem constant byte address 0x4 - core index']
  #allocation1 [shape = 'u32[144,128]{1,0:T(1,128)}', space=vmem, size = 0x12000, scoped, tag = 'internal scratch']
  %s0 = inlined_call_operand.vmem [shape: f32[8,8,256], index: 0, kind: input, shape index: {}]
  %s1 = inlined_call_operand.vmem [shape: f32[72,256], index: 1, kind: input, shape index: {}, may-alias: {1,4}]
  %s2 = inlined_call_operand.vmem [shape: f32[8,72], index: 2, kind: input, shape index: {}]
  %s3 = inlined_call_operand.vmem [shape: f32[8,1], index: 3, kind: input, shape index: {}]
  %s4 = inlined_call_operand.vmem [shape: f32[72,256], index: 4, kind: input, shape index: {}, may-alias: {1,4}]
  %s5 = inlined_call_operand.vmem [shape: f32[8,72], index: 5, kind: input, shape index: {}]
  %s6 = inlined_call_operand.vmem [shape: f32[8,1], index: 6, kind: input, shape index: {}]
  %s7 = inlined_call_operand.vmem [shape: f32[8,8,256], index: 7, kind: output, shape index: {}]
  %s8 = sld [smem:[#allocation0]]
  $region61: #{conv_lr_forward.1} parent=0
    _
  %s10 = ssub.s32 1, %s8
  %s11 = scalar_select 0, %s10, %s8
  loop: start=0, step=1, limit=4
  $region2: #{conv_lr_forward.1} parent=0 // loop_pre_header
    _
  $region3: #{conv_lr_forward.1} parent=0 // loop_header
    %s13 = sphi 0, %s17
    %p14 = scmp.ge.s32.totalorder %s13, 4
    %s23 = sphi 0, %s25
    %s26 = sphi 0, %s23
    %s27 = sphi 0, %s26
    %s43 = sphi 0, %s27
    %s47 = sphi 0, %s47
    %s49 = sphi 0, %s47
    %s50 = sphi 0, %s49
    %s64 = sphi 0, %s50
    %s68 = sphi 0, %s68
    %s70 = sphi 0, %s68
    %s71 = sphi 0, %s70
    %s85 = sphi 0, %s71
    %s89 = sphi 0, %s89
    %s91 = sphi 0, %s89
    %s92 = sphi 0, %s91
    %s106 = sphi 0, %s92
    %s110 = sphi 0, %s110
    %s112 = sphi 0, %s110
    %s113 = sphi 0, %s112
    %s127 = sphi 0, %s113
    %s131 = sphi 0, %s131
    %s133 = sphi 0, %s131
    %s134 = sphi 0, %s133
    %s148 = sphi 0, %s134
    %s152 = sphi 0, %s152
    %s154 = sphi 0, %s152
    %s155 = sphi 0, %s154
    %s169 = sphi 0, %s155
    %s175 = sphi 0, %s177
    %s178 = sphi 0, %s175
    %s179 = sphi 0, %s178
    %s195 = sphi 0, %s179
  $region4: #{conv_lr_forward.1} parent=0 // loop_header_branch
    %16 = sbr.rel (%p14) target = $region8
  $region5: #{conv_lr_forward.1} parent=0 // loop_body
    %s18 = ssub.s32 %s13, 1
    %s19 = ssub.s32 %s13, 2
    %s20 = sadd.s32 %s13, 1
    %s21 = ssub.s32 %s13, %s20
    %p22 = scmp.eq.s32.totalorder %s21, 0
    %s24 = sadd.s32 %s23, 1
    %s25 = scalar_select %p22, %s23, %s24
    %p28 = pneg %p22
    %p29 = scmp.eq.s32.totalorder %s13, 1
    %p30 = por %p28, %p29
    %p31 = scmp.ne.s32.totalorder %s23, %s26
    %p32 = scmp.eq.s32.totalorder %s13, 0
    %p33 = por %p31, %p32
    %p34 = scmp.ne.s32.totalorder %s23, %s26
    %p35 = scmp.eq.s32.totalorder %s18, 1
    %p36 = por %p34, %p35
    %p37 = scmp.ne.s32.totalorder %s26, %s27
    %p38 = scmp.eq.s32.totalorder %s18, 0
    %p39 = por %p37, %p38
    %p40 = scmp.ne.s32.totalorder %s26, %s27
    %p41 = scmp.eq.s32.totalorder %s19, 1
    %p42 = por %p40, %p41
    %p44 = scmp.ne.s32.totalorder %s27, %s43
    %p45 = scmp.eq.s32.totalorder %s19, 0
    %p46 = por %p44, %p45
    %s48 = sadd.s32 %s47, 1
    %p51 = scmp.eq.s32.totalorder %s13, 1
    %p52 = scmp.ne.s32.totalorder %s47, %s49
    %p53 = scmp.eq.s32.totalorder %s13, 0
    %p54 = por %p52, %p53
    %p55 = scmp.ne.s32.totalorder %s47, %s49
    %p56 = scmp.eq.s32.totalorder %s18, 1
    %p57 = por %p55, %p56
    %p58 = scmp.ne.s32.totalorder %s49, %s50
    %p59 = scmp.eq.s32.totalorder %s18, 0
    %p60 = por %p58, %p59
    %p61 = scmp.ne.s32.totalorder %s49, %s50
    %p62 = scmp.eq.s32.totalorder %s19, 1
    %p63 = por %p61, %p62
    %p65 = scmp.ne.s32.totalorder %s50, %s64
    %p66 = scmp.eq.s32.totalorder %s19, 0
    %p67 = por %p65, %p66
    %s69 = sadd.s32 %s68, 1
    %p72 = scmp.eq.s32.totalorder %s13, 1
    %p73 = scmp.ne.s32.totalorder %s68, %s70
    %p74 = scmp.eq.s32.totalorder %s13, 0
    %p75 = por %p73, %p74
    %p76 = scmp.ne.s32.totalorder %s68, %s70
    %p77 = scmp.eq.s32.totalorder %s18, 1
    %p78 = por %p76, %p77
    %p79 = scmp.ne.s32.totalorder %s70, %s71
    %p80 = scmp.eq.s32.totalorder %s18, 0
    %p81 = por %p79, %p80
    %p82 = scmp.ne.s32.totalorder %s70, %s71
    %p83 = scmp.eq.s32.totalorder %s19, 1
    %p84 = por %p82, %p83
    %p86 = scmp.ne.s32.totalorder %s71, %s85
    %p87 = scmp.eq.s32.totalorder %s19, 0
    %p88 = por %p86, %p87
    %s90 = sadd.s32 %s89, 1
    %p93 = scmp.eq.s32.totalorder %s13, 1
    %p94 = scmp.ne.s32.totalorder %s89, %s91
    %p95 = scmp.eq.s32.totalorder %s13, 0
    %p96 = por %p94, %p95
    %p97 = scmp.ne.s32.totalorder %s89, %s91
    %p98 = scmp.eq.s32.totalorder %s18, 1
    %p99 = por %p97, %p98
    %p100 = scmp.ne.s32.totalorder %s91, %s92
    %p101 = scmp.eq.s32.totalorder %s18, 0
    %p102 = por %p100, %p101
    %p103 = scmp.ne.s32.totalorder %s91, %s92
    %p104 = scmp.eq.s32.totalorder %s19, 1
    %p105 = por %p103, %p104
    %p107 = scmp.ne.s32.totalorder %s92, %s106
    %p108 = scmp.eq.s32.totalorder %s19, 0
    %p109 = por %p107, %p108
    %s111 = sadd.s32 %s110, 1
    %p114 = scmp.eq.s32.totalorder %s13, 1
    %p115 = scmp.ne.s32.totalorder %s110, %s112
    %p116 = scmp.eq.s32.totalorder %s13, 0
    %p117 = por %p115, %p116
    %p118 = scmp.ne.s32.totalorder %s110, %s112
    %p119 = scmp.eq.s32.totalorder %s18, 1
    %p120 = por %p118, %p119
    %p121 = scmp.ne.s32.totalorder %s112, %s113
    %p122 = scmp.eq.s32.totalorder %s18, 0
    %p123 = por %p121, %p122
    %p124 = scmp.ne.s32.totalorder %s112, %s113
    %p125 = scmp.eq.s32.totalorder %s19, 1
    %p126 = por %p124, %p125
    %p128 = scmp.ne.s32.totalorder %s113, %s127
    %p129 = scmp.eq.s32.totalorder %s19, 0
    %p130 = por %p128, %p129
    %s132 = sadd.s32 %s131, 1
    %p135 = scmp.eq.s32.totalorder %s13, 1
    %p136 = scmp.ne.s32.totalorder %s131, %s133
    %p137 = scmp.eq.s32.totalorder %s13, 0
    %p138 = por %p136, %p137
    %p139 = scmp.ne.s32.totalorder %s131, %s133
    %p140 = scmp.eq.s32.totalorder %s18, 1
    %p141 = por %p139, %p140
    %p142 = scmp.ne.s32.totalorder %s133, %s134
    %p143 = scmp.eq.s32.totalorder %s18, 0
    %p144 = por %p142, %p143
    %p145 = scmp.ne.s32.totalorder %s133, %s134
    %p146 = scmp.eq.s32.totalorder %s19, 1
    %p147 = por %p145, %p146
    %p149 = scmp.ne.s32.totalorder %s134, %s148
    %p150 = scmp.eq.s32.totalorder %s19, 0
    %p151 = por %p149, %p150
    %s153 = sadd.s32 %s152, 1
    %p156 = scmp.eq.s32.totalorder %s13, 1
    %p157 = scmp.ne.s32.totalorder %s152, %s154
    %p158 = scmp.eq.s32.totalorder %s13, 0
    %p159 = por %p157, %p158
    %p160 = scmp.ne.s32.totalorder %s152, %s154
    %p161 = scmp.eq.s32.totalorder %s18, 1
    %p162 = por %p160, %p161
    %p163 = scmp.ne.s32.totalorder %s154, %s155
    %p164 = scmp.eq.s32.totalorder %s18, 0
    %p165 = por %p163, %p164
    %p166 = scmp.ne.s32.totalorder %s154, %s155
    %p167 = scmp.eq.s32.totalorder %s19, 1
    %p168 = por %p166, %p167
    %p170 = scmp.ne.s32.totalorder %s155, %s169
    %p171 = scmp.eq.s32.totalorder %s19, 0
    %p172 = por %p170, %p171
    %s173 = ssub.s32 %s13, %s20
    %p174 = scmp.eq.s32.totalorder %s173, 0
    %s176 = sadd.s32 %s175, 1
    %s177 = scalar_select %p174, %s175, %s176
    %p180 = pneg %p174
    %p181 = scmp.eq.s32.totalorder %s13, 1
    %p182 = por %p180, %p181
    %p183 = scmp.ne.s32.totalorder %s175, %s178
    %p184 = scmp.eq.s32.totalorder %s13, 0
    %p185 = por %p183, %p184
    %p186 = scmp.ne.s32.totalorder %s175, %s178
    %p187 = scmp.eq.s32.totalorder %s18, 1
    %p188 = por %p186, %p187
    %p189 = scmp.ne.s32.totalorder %s178, %s179
    %p190 = scmp.eq.s32.totalorder %s18, 0
    %p191 = por %p189, %p190
    %p192 = scmp.ne.s32.totalorder %s178, %s179
    %p193 = scmp.eq.s32.totalorder %s19, 1
    %p194 = por %p192, %p193
    %p196 = scmp.ne.s32.totalorder %s179, %s195
    %p197 = scmp.eq.s32.totalorder %s19, 0
    %p198 = por %p196, %p197
    %p199 = scmp.le.s32.totalorder 1, %s13
    %p200 = scmp.lt.s32.totalorder %s13, 3
    %p201 = pnand %p199, %p200
    %p202 = pneg %p201
    // Predicated region
    $region9: #{conv_lr_forward.1} parent=5 // pred_check
      _
    $region10: #{conv_lr_forward.1} parent=5 // pred_check_branch
      %204 = sbr.rel (%p201) target = $region12
    $region11: #{conv_lr_forward.1} parent=5 // pred_region
      %s205 = ssub.s32 %s13, 1
      // Predicated region
      $region13: #{conv_lr_forward.1} parent=11 // pred_check
        %p206 = pneg %p60
      $region14: #{conv_lr_forward.1} parent=11 // pred_check_branch
        %208 = sbr.rel (%p206) target = $region16
      $region15: #{conv_lr_forward.1} parent=11 // pred_region
        _
      $region16: #{conv_lr_forward.1} parent=11 // pred_fallthru
        _
      // Predicated region
      $region17: #{conv_lr_forward.1} parent=11 // pred_check
        %p209 = pneg %p81
      $region18: #{conv_lr_forward.1} parent=11 // pred_check_branch
        %211 = sbr.rel (%p209) target = $region20
      $region19: #{conv_lr_forward.1} parent=11 // pred_region
        _
      $region20: #{conv_lr_forward.1} parent=11 // pred_fallthru
        _
      // Predicated region
      $region21: #{conv_lr_forward.1} parent=11 // pred_check
        %p212 = pneg %p102
      $region22: #{conv_lr_forward.1} parent=11 // pred_check_branch
        %214 = sbr.rel (%p212) target = $region24
      $region23: #{conv_lr_forward.1} parent=11 // pred_region
        _
      $region24: #{conv_lr_forward.1} parent=11 // pred_fallthru
        _
      // Predicated region
      $region25: #{conv_lr_forward.1} parent=11 // pred_check
        %p215 = pneg %p123
      $region26: #{conv_lr_forward.1} parent=11 // pred_check_branch
        %217 = sbr.rel (%p215) target = $region28
      $region27: #{conv_lr_forward.1} parent=11 // pred_region
        _
      $region28: #{conv_lr_forward.1} parent=11 // pred_fallthru
        _
      // Predicated region
      $region29: #{conv_lr_forward.1} parent=11 // pred_check
        %p218 = pneg %p144
      $region30: #{conv_lr_forward.1} parent=11 // pred_check_branch
        %220 = sbr.rel (%p218) target = $region32
      $region31: #{conv_lr_forward.1} parent=11 // pred_region
        _
      $region32: #{conv_lr_forward.1} parent=11 // pred_fallthru
        _
      // Predicated region
      $region33: #{conv_lr_forward.1} parent=11 // pred_check
        %p221 = pneg %p165
      $region34: #{conv_lr_forward.1} parent=11 // pred_check_branch
        %223 = sbr.rel (%p221) target = $region36
      $region35: #{conv_lr_forward.1} parent=11 // pred_region
        _
      $region36: #{conv_lr_forward.1} parent=11 // pred_fallthru
        _
    $region12: #{conv_lr_forward.1} parent=5 // pred_fallthru
      _
    %p224 = scmp.lt.s32.totalorder %s13, 2
    // Predicated region
    $region37: #{conv_lr_forward.1} parent=5 // pred_check
      %p225 = pneg %p224
    $region38: #{conv_lr_forward.1} parent=5 // pred_check_branch
      %227 = sbr.rel (%p225) target = $region40
    $region39: #{conv_lr_forward.1} parent=5 // pred_region
      // Predicated region
      $region41: #{conv_lr_forward.1} parent=39 // pred_check
        %p228 = pneg %p33
      $region42: #{conv_lr_forward.1} parent=39 // pred_check_branch
        %230 = sbr.rel (%p228) target = $region44
      $region43: #{conv_lr_forward.1} parent=39 // pred_region
        %s231 = smul.u32 4, %s13
        %p232 = scmp.lt.s32.totalorder %s231, 7
        %s233 = scalar_select %p232, %s231, 7
        %s234 = smul.addr %s233, 2
        %s235 = smul.addr %s234, 8
        %s236 = scalar_lea.vmem %s0, %s235
        %s237 = smul.u32 4, %s13
      $region44: #{conv_lr_forward.1} parent=39 // pred_fallthru
        _
    $region40: #{conv_lr_forward.1} parent=5 // pred_fallthru
      _
    %p238 = scmp.le.s32.totalorder 1, %s13
    %p239 = scmp.lt.s32.totalorder %s13, 3
    %p240 = pnand %p238, %p239
    %p241 = pneg %p240
    // Predicated region
    $region45: #{conv_lr_forward.1} parent=5 // pred_check
      _
    $region46: #{conv_lr_forward.1} parent=5 // pred_check_branch
      %243 = sbr.rel (%p240) target = $region48
    $region47: #{conv_lr_forward.1} parent=5 // pred_region
      %s244 = ssub.s32 %s13, 1
      %s245 = smul.u32 4, %s18
      %p246 = scmp.lt.s32.totalorder %s245, 7
      %s247 = scalar_select %p246, %s245, 7
      %s248 = smul.addr %s247, 2
      %s249 = smul.addr %s248, 8
      %s250 = scalar_lea.vmem %s0, %s249
      %p251 = pneg %p39
      %p252 = pneg %p36
      %p253 = pneg %p60
      %p254 = pneg %p57
      %p255 = pneg %p81
      %p256 = pneg %p78
      %p257 = pneg %p102
      %p258 = pneg %p99
      %p259 = pneg %p123
      %p260 = pneg %p120
      %p261 = pneg %p144
      %p262 = pneg %p141
      %p263 = pneg %p165
      %p264 = pneg %p162
      %p265 = pneg %p191
      %p266 = pneg %p188
      %s267 = smul.u32 4, %s18
      %p268 = scmp.lt.s32.totalorder %s267, 7
      %s269 = scalar_select %p268, %s267, 7
      %s270 = smul.addr %s269, 2
      %s271 = smul.addr %s270, 8
      %s272 = scalar_lea.vmem %s7, %s271
      %s273 = smul.u32 4, %s18
      %p274 = scmp.lt.s32.totalorder %s273, 7
      %s275 = scalar_select %p274, %s273, 7
      %s276 = smul.addr %s275, 2
      %s277 = smul.addr %s276, 8
      %s278 = scalar_lea.vmem %s0, %s277
      %s279 = smul.u32 4, %s18
      %s280 = smul.u32 4, %s18
      %p281 = scmp.lt.s32.totalorder %s280, 7
      %s282 = scalar_select %p281, %s280, 7
      %s283 = smul.addr %s282, 2
      %s284 = smul.addr %s283, 8
      %s285 = scalar_lea.vmem %s7, %s284
      %s286 = smul.u32 4, %s18
      %v287 = vld [vmem:[%s1] sm:$0xff]
      %v288 = vld [vmem:[%s1 + $0x8] sm:$0xff]
      %v289 = vld [vmem:[%s1 + $0x10] sm:$0xff]
      %v290 = vld [vmem:[%s1 + $0x18] sm:$0xff]
      %v291 = vld [vmem:[%s1 + $0x20] sm:$0xff]
      %v292 = vld [vmem:[%s1 + $0x28] sm:$0xff]
      %v293 = vld [vmem:[%s1 + $0x30] sm:$0xff]
      %v294 = vld [vmem:[%s1 + $0x38] sm:$0xff]
      %v295 = vld [vmem:[%s1 + $0x40] sm:$0xff]
      %v296 = vld [vmem:[%s1 + $0x48] sm:$0xff]
      %v297 = vld [vmem:[%s1 + $0x50] sm:$0xff]
      %v298 = vld [vmem:[%s1 + $0x58] sm:$0xff]
      %v299 = vld [vmem:[%s1 + $0x60] sm:$0xff]
      %v300 = vld [vmem:[%s1 + $0x68] sm:$0xff]
      %v301 = vld [vmem:[%s1 + $0x70] sm:$0xff]
      %v302 = vld [vmem:[%s1 + $0x78] sm:$0xff]
      %v303 = vld [vmem:[%s1 + $0x80] sm:$0xff]
      %v304 = vld [vmem:[%s1 + $0x88] sm:$0xff]
      %v305 = vld [vmem:[%s2] sm:$0xff]
      %v306 = vld [vmem:[%s3] sm:$0xff]
      %v307 = vld [vmem:[%s4] sm:$0xff]
      %v308 = vld [vmem:[%s4 + $0x8] sm:$0xff]
      %v309 = vld [vmem:[%s4 + $0x10] sm:$0xff]
      %v310 = vld [vmem:[%s4 + $0x18] sm:$0xff]
      %v311 = vld [vmem:[%s4 + $0x20] sm:$0xff]
      %v312 = vld [vmem:[%s4 + $0x28] sm:$0xff]
      %v313 = vld [vmem:[%s4 + $0x30] sm:$0xff]
      %v314 = vld [vmem:[%s4 + $0x38] sm:$0xff]
      %v315 = vld [vmem:[%s4 + $0x40] sm:$0xff]
      %v316 = vld [vmem:[%s4 + $0x48] sm:$0xff]
      %v317 = vld [vmem:[%s4 + $0x50] sm:$0xff]
      %v318 = vld [vmem:[%s4 + $0x58] sm:$0xff]
      %v319 = vld [vmem:[%s4 + $0x60] sm:$0xff]
      %v320 = vld [vmem:[%s4 + $0x68] sm:$0xff]
      %v321 = vld [vmem:[%s4 + $0x70] sm:$0xff]
      %v322 = vld [vmem:[%s4 + $0x78] sm:$0xff]
      %v323 = vld [vmem:[%s4 + $0x80] sm:$0xff]
      %v324 = vld [vmem:[%s4 + $0x88] sm:$0xff]
      %v325 = vld [vmem:[%s5] sm:$0xff]
      %v326 = vld [vmem:[%s6] sm:$0xff]
      %v327 = vld [vmem:[%s278] sm:$0xff]
      %v328 = vld [vmem:[%s278 + $0x8] sm:$0xff]
      %329 = vrot.lane.b32.xlu0 %v327, 17
      %v330 = vpop.permute.xlu0 %329
      %331 = vrot.lane.b32.xlu0 %v328, 17
      %v332 = vpop.permute.xlu0 %331
      %v333 = vlaneseq
      %v334 = vand.u32 %v333, 127
      %vm335 = vcmp.lt.s32.totalorder %v334, 17
      %v336 = vsel %vm335, %v330, %v332
      %v337 = vsel %vm335, %v332, %v330
      %338 = vrot.lane.b32.xlu0 %v327, 16
      %v339 = vpop.permute.xlu0 %338
      %340 = vrot.lane.b32.xlu0 %v328, 16
      %v341 = vpop.permute.xlu0 %340
      %vm342 = vcmp.lt.s32.totalorder %v334, 16
      %v343 = vsel %vm342, %v339, %v341
      %v344 = vsel %vm342, %v341, %v339
      %345 = vrot.lane.b32.xlu0 %v327, 15
      %v346 = vpop.permute.xlu0 %345
      %347 = vrot.lane.b32.xlu0 %v328, 15
      %v348 = vpop.permute.xlu0 %347
      %vm349 = vcmp.lt.s32.totalorder %v334, 15
      %v350 = vsel %vm349, %v346, %v348
      %v351 = vsel %vm349, %v348, %v346
      %352 = vrot.lane.b32.xlu0 %v327, 1
      %v353 = vpop.permute.xlu0 %352
      %354 = vrot.lane.b32.xlu0 %v328, 1
      %v355 = vpop.permute.xlu0 %354
      %vm356 = vcmp.lt.s32.totalorder %v334, 1
      %v357 = vsel %vm356, %v353, %v355
      %v358 = vsel %vm356, %v355, %v353
      %359 = vrot.lane.b32.xlu0 %v327, 127
      %v360 = vpop.permute.xlu0 %359
      %361 = vrot.lane.b32.xlu0 %v328, 127
      %v362 = vpop.permute.xlu0 %361
      %vm363 = vcmp.lt.s32.totalorder %v334, 127
      %v364 = vsel %vm363, %v360, %v362
      %v365 = vsel %vm363, %v362, %v360
      %366 = vrot.lane.b32.xlu0 %v327, 113
      %v367 = vpop.permute.xlu0 %366
      %368 = vrot.lane.b32.xlu0 %v328, 113
      %v369 = vpop.permute.xlu0 %368
      %vm370 = vcmp.lt.s32.totalorder %v334, 113
      %v371 = vsel %vm370, %v367, %v369
      %v372 = vsel %vm370, %v369, %v367
      %373 = vrot.lane.b32.xlu0 %v327, 112
      %v374 = vpop.permute.xlu0 %373
      %375 = vrot.lane.b32.xlu0 %v328, 112
      %v376 = vpop.permute.xlu0 %375
      %vm377 = vcmp.lt.s32.totalorder %v334, 112
      %v378 = vsel %vm377, %v374, %v376
      %v379 = vsel %vm377, %v376, %v374
      %380 = vrot.lane.b32.xlu0 %v327, 111
      %v381 = vpop.permute.xlu0 %380
      %382 = vrot.lane.b32.xlu0 %v328, 111
      %v383 = vpop.permute.xlu0 %382
      %vm384 = vcmp.lt.s32.totalorder %v334, 111
      %v385 = vsel %vm384, %v381, %v383
      %v386 = vsel %vm384, %v383, %v381
      %v387 = vmul.f32 %v337, %v287
      %v388 = vmul.f32 %v336, %v288
      %v389 = vmul.f32 %v344, %v289
      %v390 = vmul.f32 %v343, %v290
      %v391 = vmul.f32 %v351, %v291
      %v392 = vmul.f32 %v350, %v292
      %v393 = vmul.f32 %v358, %v293
      %v394 = vmul.f32 %v357, %v294
      %v395 = vmul.f32 %v327, %v295
      %v396 = vmul.f32 %v328, %v296
      %v397 = vmul.f32 %v364, %v297
      %v398 = vmul.f32 %v365, %v298
      %v399 = vmul.f32 %v371, %v299
      %v400 = vmul.f32 %v372, %v300
      %v401 = vmul.f32 %v378, %v301
      %v402 = vmul.f32 %v379, %v302
      %v403 = vmul.f32 %v385, %v303
      %v404 = vmul.f32 %v386, %v304
      %406 = vset.pattern.permute.xlu0 0
      %407 = vperm.xlu0 %406, %v306
      %v408 = vpop.permute.xlu0 %407
      %vm410 = vcmask 588800
      %v412 = vsel %vm410, %v305, 0
      %414 = vmatprep.subr.mxu0 %v388
      %415 = vmatpush1.msra.mxu0 %v387
      %416 = vmatprep.subr.mxu0 %v390
      %417 = vmatpush1.msra.mxu0 %v389
      %418 = vmatprep.subr.mxu0 %v392
      %419 = vmatpush1.msra.mxu0 %v391
      %420 = vmatprep.subr.mxu0 %v394
      %421 = vmatpush1.msra.mxu0 %v393
      %422 = vmatprep.subr.mxu0 %v396
      %423 = vmatpush1.msra.mxu0 %v395
      %424 = vmatprep.subr.mxu0 %v398
      %425 = vmatpush1.msra.mxu0 %v397
      %426 = vmatprep.subr.mxu0 %v400
      %427 = vmatpush1.msra.mxu0 %v399
      %428 = vmatprep.subr.mxu0 %v402
      %429 = vmatpush1.msra.mxu0 %v401
      %430 = vmatprep.subr.mxu0 %v404
      %431 = vmatpush1.msra.mxu0 %v403
      %432 = vmatprep.subr.mxu0 0.0
      %433 = vmatpush1.msra.mxu0 0.0
      %434 = vmatprep.subr.mxu0 0.0
      %435 = vmatpush1.msra.mxu0 0.0
      %436 = vmatprep.subr.mxu0 0.0
      %437 = vmatpush1.msra.mxu0 0.0
      %438 = vmatprep.subr.mxu0 0.0
      %439 = vmatpush1.msra.mxu0 0.0
      %440 = vmatprep.subr.mxu0 0.0
      %441 = vmatpush1.msra.mxu0 0.0
      %442 = vmatprep.subr.mxu0 0.0
      %443 = vmatpush1.msra.mxu0 0.0
      %444 = vmatprep.subr.mxu0 0.0
      %445 = vmatpush1.msra.mxu0 0.0
      %446 = vmatprep.subr.mxu0 0.0
      %447 = vmatpush1.msra.mxu0 0.0
      %448 = vmatprep.subr.mxu0 0.0
      %449 = vmatpush1.msra.mxu0 0.0
      %450 = vmatprep.subr.mxu0 0.0
      %451 = vmatpush1.msra.mxu0 0.0
      %452 = vmatprep.subr.mxu0 0.0
      %453 = vmatpush1.msra.mxu0 0.0
      %454 = vmatprep.subr.mxu0 0.0
      %455 = vmatpush1.msra.mxu0 0.0
      %456 = vmatprep.subr.mxu0 0.0
      %457 = vmatpush1.msra.mxu0 0.0
      %458 = vmatprep.subr.mxu0 0.0
      %459 = vmatpush1.msra.mxu0 0.0
      %460 = vmatprep.subr.mxu0 0.0
      %461 = vmatpush1.msra.mxu0 0.0
      %462 = vmatprep.subr.mxu0 0.0
      %463 = vmatpush1.msra.mxu0 0.0
      %464 = vmatprep.subr.mxu0 0.0
      %465 = vmatpush1.msra.mxu0 0.0
      %466 = vmatprep.subr.mxu0 0.0
      %467 = vmatpush1.msra.mxu0 0.0
      %468 = vmatprep.subr.mxu0 0.0
      %469 = vmatpush1.msra.mxu0 0.0
      %470 = vmatprep.subr.mxu0 0.0
      %471 = vmatpush1.msra.mxu0 0.0
      %472 = vmatprep.subr.mxu0 0.0
      %473 = vmatpush1.msra.mxu0 0.0
      %474 = vmatprep.subr.mxu0 0.0
      %475 = vmatpush1.msra.mxu0 0.0
      %476 = vmatprep.subr.mxu0 0.0
      %477 = vmatpush1.msra.mxu0 0.0
      %478 = vmatprep.mubr.f32.mxu0 0.0
      %479 = vmatmul.mubr.f32.gmra.mrb[0].mxu0 %v412
      %v480 = vpop.f32.mrb[0].mxu0
      %v481 = vadd.f32 %v408, %v480
      %v482 = vpop.f32.mrb[0].mxu0
      %v483 = vadd.f32 %v408, %v482
      %484 = vdwg.mxu0
      %vm485 = vcmp.ge.f32.partialorder %v481, 0.0
      %vm486 = vcmp.ge.f32.partialorder %v483, 0.0
      %v487 = vmul.f32 %v481, 0.1
      %v488 = vmul.f32 %v483, 0.1
      %v489 = vsel %vm485, %v481, %v487
      %v490 = vsel %vm486, %v483, %v488
      %491 = vrot.lane.b32.xlu0 %v489, 17
      %v492 = vpop.permute.xlu0 %491
      %493 = vrot.lane.b32.xlu0 %v490, 17
      %v494 = vpop.permute.xlu0 %493
      %v495 = vsel %vm335, %v492, %v494
      %v496 = vsel %vm335, %v494, %v492
      %497 = vrot.lane.b32.xlu0 %v489, 16
      %v498 = vpop.permute.xlu0 %497
      %499 = vrot.lane.b32.xlu0 %v490, 16
      %v500 = vpop.permute.xlu0 %499
      %v501 = vsel %vm342, %v498, %v500
      %v502 = vsel %vm342, %v500, %v498
      %503 = vrot.lane.b32.xlu0 %v489, 15
      %v504 = vpop.permute.xlu0 %503
      %505 = vrot.lane.b32.xlu0 %v490, 15
      %v506 = vpop.permute.xlu0 %505
      %v507 = vsel %vm349, %v504, %v506
      %v508 = vsel %vm349, %v506, %v504
      %509 = vrot.lane.b32.xlu0 %v489, 1
      %v510 = vpop.permute.xlu0 %509
      %511 = vrot.lane.b32.xlu0 %v490, 1
      %v512 = vpop.permute.xlu0 %511
      %v513 = vsel %vm356, %v510, %v512
      %v514 = vsel %vm356, %v512, %v510
      %515 = vrot.lane.b32.xlu0 %v489, 127
      %v516 = vpop.permute.xlu0 %515
      %517 = vrot.lane.b32.xlu0 %v490, 127
      %v518 = vpop.permute.xlu0 %517
      %v519 = vsel %vm363, %v516, %v518
      %v520 = vsel %vm363, %v518, %v516
      %521 = vrot.lane.b32.xlu0 %v489, 113
      %v522 = vpop.permute.xlu0 %521
      %523 = vrot.lane.b32.xlu0 %v490, 113
      %v524 = vpop.permute.xlu0 %523
      %v525 = vsel %vm370, %v522, %v524
      %v526 = vsel %vm370, %v524, %v522
      %527 = vrot.lane.b32.xlu0 %v489, 112
      %v528 = vpop.permute.xlu0 %527
      %529 = vrot.lane.b32.xlu0 %v490, 112
      %v530 = vpop.permute.xlu0 %529
      %v531 = vsel %vm377, %v528, %v530
      %v532 = vsel %vm377, %v530, %v528
      %533 = vrot.lane.b32.xlu0 %v489, 111
      %v534 = vpop.permute.xlu0 %533
      %535 = vrot.lane.b32.xlu0 %v490, 111
      %v536 = vpop.permute.xlu0 %535
      %v537 = vsel %vm384, %v534, %v536
      %v538 = vsel %vm384, %v536, %v534
      %v539 = vmul.f32 %v496, %v307
      %v540 = vmul.f32 %v495, %v308
      %v541 = vmul.f32 %v502, %v309
      %v542 = vmul.f32 %v501, %v310
      %v543 = vmul.f32 %v508, %v311
      %v544 = vmul.f32 %v507, %v312
      %v545 = vmul.f32 %v514, %v313
      %v546 = vmul.f32 %v513, %v314
      %v547 = vmul.f32 %v489, %v315
      %v548 = vmul.f32 %v490, %v316
      %v549 = vmul.f32 %v519, %v317
      %v550 = vmul.f32 %v520, %v318
      %v551 = vmul.f32 %v525, %v319
      %v552 = vmul.f32 %v526, %v320
      %v553 = vmul.f32 %v531, %v321
      %v554 = vmul.f32 %v532, %v322
      %v555 = vmul.f32 %v537, %v323
      %v556 = vmul.f32 %v538, %v324
      %558 = vset.pattern.permute.xlu0 0
      %559 = vperm.xlu0 %558, %v326
      %v560 = vpop.permute.xlu0 %559
      %v563 = vsel %vm410, %v325, 0
      %565 = vmatprep.subr.mxu0 %v540
      %566 = vmatpush1.msra.mxu0 %v539
      %567 = vmatprep.subr.mxu0 %v542
      %568 = vmatpush1.msra.mxu0 %v541
      %569 = vmatprep.subr.mxu0 %v544
      %570 = vmatpush1.msra.mxu0 %v543
      %571 = vmatprep.subr.mxu0 %v546
      %572 = vmatpush1.msra.mxu0 %v545
      %573 = vmatprep.subr.mxu0 %v548
      %574 = vmatpush1.msra.mxu0 %v547
      %575 = vmatprep.subr.mxu0 %v550
      %576 = vmatpush1.msra.mxu0 %v549
      %577 = vmatprep.subr.mxu0 %v552
      %578 = vmatpush1.msra.mxu0 %v551
      %579 = vmatprep.subr.mxu0 %v554
      %580 = vmatpush1.msra.mxu0 %v553
      %581 = vmatprep.subr.mxu0 %v556
      %582 = vmatpush1.msra.mxu0 %v555
      %583 = vmatprep.subr.mxu0 0.0
      %584 = vmatpush1.msra.mxu0 0.0
      %585 = vmatprep.subr.mxu0 0.0
      %586 = vmatpush1.msra.mxu0 0.0
      %587 = vmatprep.subr.mxu0 0.0
      %588 = vmatpush1.msra.mxu0 0.0
      %589 = vmatprep.subr.mxu0 0.0
      %590 = vmatpush1.msra.mxu0 0.0
      %591 = vmatprep.subr.mxu0 0.0
      %592 = vmatpush1.msra.mxu0 0.0
      %593 = vmatprep.subr.mxu0 0.0
      %594 = vmatpush1.msra.mxu0 0.0
      %595 = vmatprep.subr.mxu0 0.0
      %596 = vmatpush1.msra.mxu0 0.0
      %597 = vmatprep.subr.mxu0 0.0
      %598 = vmatpush1.msra.mxu0 0.0
      %599 = vmatprep.subr.mxu0 0.0
      %600 = vmatpush1.msra.mxu0 0.0
      %601 = vmatprep.subr.mxu0 0.0
      %602 = vmatpush1.msra.mxu0 0.0
      %603 = vmatprep.subr.mxu0 0.0
      %604 = vmatpush1.msra.mxu0 0.0
      %605 = vmatprep.subr.mxu0 0.0
      %606 = vmatpush1.msra.mxu0 0.0
      %607 = vmatprep.subr.mxu0 0.0
      %608 = vmatpush1.msra.mxu0 0.0
      %609 = vmatprep.subr.mxu0 0.0
      %610 = vmatpush1.msra.mxu0 0.0
      %611 = vmatprep.subr.mxu0 0.0
      %612 = vmatpush1.msra.mxu0 0.0
      %613 = vmatprep.subr.mxu0 0.0
      %614 = vmatpush1.msra.mxu0 0.0
      %615 = vmatprep.subr.mxu0 0.0
      %616 = vmatpush1.msra.mxu0 0.0
      %617 = vmatprep.subr.mxu0 0.0
      %618 = vmatpush1.msra.mxu0 0.0
      %619 = vmatprep.subr.mxu0 0.0
      %620 = vmatpush1.msra.mxu0 0.0
      %621 = vmatprep.subr.mxu0 0.0
      %622 = vmatpush1.msra.mxu0 0.0
      %623 = vmatprep.subr.mxu0 0.0
      %624 = vmatpush1.msra.mxu0 0.0
      %625 = vmatprep.subr.mxu0 0.0
      %626 = vmatpush1.msra.mxu0 0.0
      %627 = vmatprep.subr.mxu0 0.0
      %628 = vmatpush1.msra.mxu0 0.0
      %629 = vmatprep.mubr.f32.mxu0 0.0
      %630 = vmatmul.mubr.f32.gmra.mrb[0].mxu0 %v563
      %v631 = vpop.f32.mrb[0].mxu0
      %v632 = vadd.f32 %v560, %v631
      %v633 = vpop.f32.mrb[0].mxu0
      %v634 = vadd.f32 %v560, %v633
      %635 = vdwg.mxu0
      %vm636 = vcmp.ge.f32.partialorder %v632, 0.0
      %vm637 = vcmp.ge.f32.partialorder %v634, 0.0
      %v638 = vmul.f32 %v632, 0.1
      %v639 = vmul.f32 %v634, 0.1
      %v640 = vsel %vm636, %v632, %v638
      %v641 = vsel %vm637, %v634, %v639
      %642 = vst [vmem:[%s285] sm:$0xff] %v640
      %643 = vst [vmem:[%s285 + $0x8] sm:$0xff] %v641
      %s644 = scalar_lea.vmem %s278, 16
      %v645 = vld [vmem:[%s644] sm:$0xff]
      %v646 = vld [vmem:[%s644 + $0x8] sm:$0xff]
      %647 = vrot.lane.b32.xlu0 %v645, 17
      %v648 = vpop.permute.xlu0 %647
      %649 = vrot.lane.b32.xlu0 %v646, 17
      %v650 = vpop.permute.xlu0 %649
      %v651 = vsel %vm335, %v648, %v650
      %v652 = vsel %vm335, %v650, %v648
      %653 = vrot.lane.b32.xlu0 %v645, 16
      %v654 = vpop.permute.xlu0 %653
      %655 = vrot.lane.b32.xlu0 %v646, 16
      %v656 = vpop.permute.xlu0 %655
      %v657 = vsel %vm342, %v654, %v656
      %v658 = vsel %vm342, %v656, %v654
      %659 = vrot.lane.b32.xlu0 %v645, 15
      %v660 = vpop.permute.xlu0 %659
      %661 = vrot.lane.b32.xlu0 %v646, 15
      %v662 = vpop.permute.xlu0 %661
      %v663 = vsel %vm349, %v660, %v662
      %v664 = vsel %vm349, %v662, %v660
      %665 = vrot.lane.b32.xlu0 %v645, 1
      %v666 = vpop.permute.xlu0 %665
      %667 = vrot.lane.b32.xlu0 %v646, 1
      %v668 = vpop.permute.xlu0 %667
      %v669 = vsel %vm356, %v666, %v668
      %v670 = vsel %vm356, %v668, %v666
      %671 = vrot.lane.b32.xlu0 %v645, 127
      %v672 = vpop.permute.xlu0 %671
      %673 = vrot.lane.b32.xlu0 %v646, 127
      %v674 = vpop.permute.xlu0 %673
      %v675 = vsel %vm363, %v672, %v674
      %v676 = vsel %vm363, %v674, %v672
      %677 = vrot.lane.b32.xlu0 %v645, 113
      %v678 = vpop.permute.xlu0 %677
      %679 = vrot.lane.b32.xlu0 %v646, 113
      %v680 = vpop.permute.xlu0 %679
      %v681 = vsel %vm370, %v678, %v680
      %v682 = vsel %vm370, %v680, %v678
      %683 = vrot.lane.b32.xlu0 %v645, 112
      %v684 = vpop.permute.xlu0 %683
      %685 = vrot.lane.b32.xlu0 %v646, 112
      %v686 = vpop.permute.xlu0 %685
      %v687 = vsel %vm377, %v684, %v686
      %v688 = vsel %vm377, %v686, %v684
      %689 = vrot.lane.b32.xlu0 %v645, 111
      %v690 = vpop.permute.xlu0 %689
      %691 = vrot.lane.b32.xlu0 %v646, 111
      %v692 = vpop.permute.xlu0 %691
      %v693 = vsel %vm384, %v690, %v692
      %v694 = vsel %vm384, %v692, %v690
      %v695 = vmul.f32 %v652, %v287
      %v696 = vmul.f32 %v651, %v288
      %v697 = vmul.f32 %v658, %v289
      %v698 = vmul.f32 %v657, %v290
      %v699 = vmul.f32 %v664, %v291
      %v700 = vmul.f32 %v663, %v292
      %v701 = vmul.f32 %v670, %v293
      %v702 = vmul.f32 %v669, %v294
      %v703 = vmul.f32 %v645, %v295
      %v704 = vmul.f32 %v646, %v296
      %v705 = vmul.f32 %v675, %v297
      %v706 = vmul.f32 %v676, %v298
      %v707 = vmul.f32 %v681, %v299
      %v708 = vmul.f32 %v682, %v300
      %v709 = vmul.f32 %v687, %v301
      %v710 = vmul.f32 %v688, %v302
      %v711 = vmul.f32 %v693, %v303
      %v712 = vmul.f32 %v694, %v304
      %713 = vmatprep.subr.mxu0 %v696
      %714 = vmatpush1.msra.mxu0 %v695
      %715 = vmatprep.subr.mxu0 %v698
      %716 = vmatpush1.msra.mxu0 %v697
      %717 = vmatprep.subr.mxu0 %v700
      %718 = vmatpush1.msra.mxu0 %v699
      %719 = vmatprep.subr.mxu0 %v702
      %720 = vmatpush1.msra.mxu0 %v701
      %721 = vmatprep.subr.mxu0 %v704
      %722 = vmatpush1.msra.mxu0 %v703
      %723 = vmatprep.subr.mxu0 %v706
      %724 = vmatpush1.msra.mxu0 %v705
      %725 = vmatprep.subr.mxu0 %v708
      %726 = vmatpush1.msra.mxu0 %v707
      %727 = vmatprep.subr.mxu0 %v710
      %728 = vmatpush1.msra.mxu0 %v709
      %729 = vmatprep.subr.mxu0 %v712
      %730 = vmatpush1.msra.mxu0 %v711
      %731 = vmatprep.subr.mxu0 0.0
      %732 = vmatpush1.msra.mxu0 0.0
      %733 = vmatprep.subr.mxu0 0.0
      %734 = vmatpush1.msra.mxu0 0.0
      %735 = vmatprep.subr.mxu0 0.0
      %736 = vmatpush1.msra.mxu0 0.0
      %737 = vmatprep.subr.mxu0 0.0
      %738 = vmatpush1.msra.mxu0 0.0
      %739 = vmatprep.subr.mxu0 0.0
      %740 = vmatpush1.msra.mxu0 0.0
      %741 = vmatprep.subr.mxu0 0.0
      %742 = vmatpush1.msra.mxu0 0.0
      %743 = vmatprep.subr.mxu0 0.0
      %744 = vmatpush1.msra.mxu0 0.0
      %745 = vmatprep.subr.mxu0 0.0
      %746 = vmatpush1.msra.mxu0 0.0
      %747 = vmatprep.subr.mxu0 0.0
      %748 = vmatpush1.msra.mxu0 0.0
      %749 = vmatprep.subr.mxu0 0.0
      %750 = vmatpush1.msra.mxu0 0.0
      %751 = vmatprep.subr.mxu0 0.0
      %752 = vmatpush1.msra.mxu0 0.0
      %753 = vmatprep.subr.mxu0 0.0
      %754 = vmatpush1.msra.mxu0 0.0
      %755 = vmatprep.subr.mxu0 0.0
      %756 = vmatpush1.msra.mxu0 0.0
      %757 = vmatprep.subr.mxu0 0.0
      %758 = vmatpush1.msra.mxu0 0.0
      %759 = vmatprep.subr.mxu0 0.0
      %760 = vmatpush1.msra.mxu0 0.0
      %761 = vmatprep.subr.mxu0 0.0
      %762 = vmatpush1.msra.mxu0 0.0
      %763 = vmatprep.subr.mxu0 0.0
      %764 = vmatpush1.msra.mxu0 0.0
      %765 = vmatprep.subr.mxu0 0.0
      %766 = vmatpush1.msra.mxu0 0.0
      %767 = vmatprep.subr.mxu0 0.0
      %768 = vmatpush1.msra.mxu0 0.0
      %769 = vmatprep.subr.mxu0 0.0
      %770 = vmatpush1.msra.mxu0 0.0
      %771 = vmatprep.subr.mxu0 0.0
      %772 = vmatpush1.msra.mxu0 0.0
      %773 = vmatprep.subr.mxu0 0.0
      %774 = vmatpush1.msra.mxu0 0.0
      %775 = vmatprep.subr.mxu0 0.0
      %776 = vmatpush1.msra.mxu0 0.0
      %777 = vmatprep.mubr.f32.mxu0 0.0
      %778 = vmatmul.mubr.f32.gmra.mrb[0].mxu0 %v412
      %v779 = vpop.f32.mrb[0].mxu0
      %v780 = vadd.f32 %v408, %v779
      %v781 = vpop.f32.mrb[0].mxu0
      %v782 = vadd.f32 %v408, %v781
      %783 = vdwg.mxu0
      %vm784 = vcmp.ge.f32.partialorder %v780, 0.0
      %vm785 = vcmp.ge.f32.partialorder %v782, 0.0
      %v786 = vmul.f32 %v780, 0.1
      %v787 = vmul.f32 %v782, 0.1
      %v788 = vsel %vm784, %v780, %v786
      %v789 = vsel %vm785, %v782, %v787
      %790 = vrot.lane.b32.xlu0 %v788, 17
      %v791 = vpop.permute.xlu0 %790
      %792 = vrot.lane.b32.xlu0 %v789, 17
      %v793 = vpop.permute.xlu0 %792
      %v794 = vsel %vm335, %v791, %v793
      %v795 = vsel %vm335, %v793, %v791
      %796 = vrot.lane.b32.xlu0 %v788, 16
      %v797 = vpop.permute.xlu0 %796
      %798 = vrot.lane.b32.xlu0 %v789, 16
      %v799 = vpop.permute.xlu0 %798
      %v800 = vsel %vm342, %v797, %v799
      %v801 = vsel %vm342, %v799, %v797
      %802 = vrot.lane.b32.xlu0 %v788, 15
      %v803 = vpop.permute.xlu0 %802
      %804 = vrot.lane.b32.xlu0 %v789, 15
      %v805 = vpop.permute.xlu0 %804
      %v806 = vsel %vm349, %v803, %v805
      %v807 = vsel %vm349, %v805, %v803
      %808 = vrot.lane.b32.xlu0 %v788, 1
      %v809 = vpop.permute.xlu0 %808
      %810 = vrot.lane.b32.xlu0 %v789, 1
      %v811 = vpop.permute.xlu0 %810
      %v812 = vsel %vm356, %v809, %v811
      %v813 = vsel %vm356, %v811, %v809
      %814 = vrot.lane.b32.xlu0 %v788, 127
      %v815 = vpop.permute.xlu0 %814
      %816 = vrot.lane.b32.xlu0 %v789, 127
      %v817 = vpop.permute.xlu0 %816
      %v818 = vsel %vm363, %v815, %v817
      %v819 = vsel %vm363, %v817, %v815
      %820 = vrot.lane.b32.xlu0 %v788, 113
      %v821 = vpop.permute.xlu0 %820
      %822 = vrot.lane.b32.xlu0 %v789, 113
      %v823 = vpop.permute.xlu0 %822
      %v824 = vsel %vm370, %v821, %v823
      %v825 = vsel %vm370, %v823, %v821
      %826 = vrot.lane.b32.xlu0 %v788, 112
      %v827 = vpop.permute.xlu0 %826
      %828 = vrot.lane.b32.xlu0 %v789, 112
      %v829 = vpop.permute.xlu0 %828
      %v830 = vsel %vm377, %v827, %v829
      %v831 = vsel %vm377, %v829, %v827
      %832 = vrot.lane.b32.xlu0 %v788, 111
      %v833 = vpop.permute.xlu0 %832
      %834 = vrot.lane.b32.xlu0 %v789, 111
      %v835 = vpop.permute.xlu0 %834
      %v836 = vsel %vm384, %v833, %v835
      %v837 = vsel %vm384, %v835, %v833
      %v838 = vmul.f32 %v795, %v307
      %v839 = vmul.f32 %v794, %v308
      %v840 = vmul.f32 %v801, %v309
      %v841 = vmul.f32 %v800, %v310
      %v842 = vmul.f32 %v807, %v311
      %v843 = vmul.f32 %v806, %v312
      %v844 = vmul.f32 %v813, %v313
      %v845 = vmul.f32 %v812, %v314
      %v846 = vmul.f32 %v788, %v315
      %v847 = vmul.f32 %v789, %v316
      %v848 = vmul.f32 %v818, %v317
      %v849 = vmul.f32 %v819, %v318
      %v850 = vmul.f32 %v824, %v319
      %v851 = vmul.f32 %v825, %v320
      %v852 = vmul.f32 %v830, %v321
      %v853 = vmul.f32 %v831, %v322
      %v854 = vmul.f32 %v836, %v323
      %v855 = vmul.f32 %v837, %v324
      %856 = vmatprep.subr.mxu0 %v839
      %857 = vmatpush1.msra.mxu0 %v838
      %858 = vmatprep.subr.mxu0 %v841
      %859 = vmatpush1.msra.mxu0 %v840
      %860 = vmatprep.subr.mxu0 %v843
      %861 = vmatpush1.msra.mxu0 %v842
      %862 = vmatprep.subr.mxu0 %v845
      %863 = vmatpush1.msra.mxu0 %v844
      %864 = vmatprep.subr.mxu0 %v847
      %865 = vmatpush1.msra.mxu0 %v846
      %866 = vmatprep.subr.mxu0 %v849
      %867 = vmatpush1.msra.mxu0 %v848
      %868 = vmatprep.subr.mxu0 %v851
      %869 = vmatpush1.msra.mxu0 %v850
      %870 = vmatprep.subr.mxu0 %v853
      %871 = vmatpush1.msra.mxu0 %v852
      %872 = vmatprep.subr.mxu0 %v855
      %873 = vmatpush1.msra.mxu0 %v854
      %874 = vmatprep.subr.mxu0 0.0
      %875 = vmatpush1.msra.mxu0 0.0
      %876 = vmatprep.subr.mxu0 0.0
      %877 = vmatpush1.msra.mxu0 0.0
      %878 = vmatprep.subr.mxu0 0.0
      %879 = vmatpush1.msra.mxu0 0.0
      %880 = vmatprep.subr.mxu0 0.0
      %881 = vmatpush1.msra.mxu0 0.0
      %882 = vmatprep.subr.mxu0 0.0
      %883 = vmatpush1.msra.mxu0 0.0
      %884 = vmatprep.subr.mxu0 0.0
      %885 = vmatpush1.msra.mxu0 0.0
      %886 = vmatprep.subr.mxu0 0.0
      %887 = vmatpush1.msra.mxu0 0.0
      %888 = vmatprep.subr.mxu0 0.0
      %889 = vmatpush1.msra.mxu0 0.0
      %890 = vmatprep.subr.mxu0 0.0
      %891 = vmatpush1.msra.mxu0 0.0
      %892 = vmatprep.subr.mxu0 0.0
      %893 = vmatpush1.msra.mxu0 0.0
      %894 = vmatprep.subr.mxu0 0.0
      %895 = vmatpush1.msra.mxu0 0.0
      %896 = vmatprep.subr.mxu0 0.0
      %897 = vmatpush1.msra.mxu0 0.0
      %898 = vmatprep.subr.mxu0 0.0
      %899 = vmatpush1.msra.mxu0 0.0
      %900 = vmatprep.subr.mxu0 0.0
      %901 = vmatpush1.msra.mxu0 0.0
      %902 = vmatprep.subr.mxu0 0.0
      %903 = vmatpush1.msra.mxu0 0.0
      %904 = vmatprep.subr.mxu0 0.0
      %905 = vmatpush1.msra.mxu0 0.0
      %906 = vmatprep.subr.mxu0 0.0
      %907 = vmatpush1.msra.mxu0 0.0
      %908 = vmatprep.subr.mxu0 0.0
      %909 = vmatpush1.msra.mxu0 0.0
      %910 = vmatprep.subr.mxu0 0.0
      %911 = vmatpush1.msra.mxu0 0.0
      %912 = vmatprep.subr.mxu0 0.0
      %913 = vmatpush1.msra.mxu0 0.0
      %914 = vmatprep.subr.mxu0 0.0
      %915 = vmatpush1.msra.mxu0 0.0
      %916 = vmatprep.subr.mxu0 0.0
      %917 = vmatpush1.msra.mxu0 0.0
      %918 = vmatprep.subr.mxu0 0.0
      %919 = vmatpush1.msra.mxu0 0.0
      %920 = vmatprep.mubr.f32.mxu0 0.0
      %921 = vmatmul.mubr.f32.gmra.mrb[0].mxu0 %v563
      %v922 = vpop.f32.mrb[0].mxu0
      %v923 = vadd.f32 %v560, %v922
      %v924 = vpop.f32.mrb[0].mxu0
      %v925 = vadd.f32 %v560, %v924
      %926 = vdwg.mxu0
      %vm927 = vcmp.ge.f32.partialorder %v923, 0.0
      %vm928 = vcmp.ge.f32.partialorder %v925, 0.0
      %v929 = vmul.f32 %v923, 0.1
      %v930 = vmul.f32 %v925, 0.1
      %v931 = vsel %vm927, %v923, %v929
      %v932 = vsel %vm928, %v925, %v930
      %s933 = scalar_lea.vmem %s285, 16
      %934 = vst [vmem:[%s933] sm:$0xff] %v931
      %935 = vst [vmem:[%s933 + $0x8] sm:$0xff] %v932
      %s936 = scalar_lea.vmem %s278, 32
      %v937 = vld [vmem:[%s936] sm:$0xff]
      %v938 = vld [vmem:[%s936 + $0x8] sm:$0xff]
      %939 = vrot.lane.b32.xlu0 %v937, 17
      %v940 = vpop.permute.xlu0 %939
      %941 = vrot.lane.b32.xlu0 %v938, 17
      %v942 = vpop.permute.xlu0 %941
      %v943 = vsel %vm335, %v940, %v942
      %v944 = vsel %vm335, %v942, %v940
      %945 = vrot.lane.b32.xlu0 %v937, 16
      %v946 = vpop.permute.xlu0 %945
      %947 = vrot.lane.b32.xlu0 %v938, 16
      %v948 = vpop.permute.xlu0 %947
      %v949 = vsel %vm342, %v946, %v948
      %v950 = vsel %vm342, %v948, %v946
      %951 = vrot.lane.b32.xlu0 %v937, 15
      %v952 = vpop.permute.xlu0 %951
      %953 = vrot.lane.b32.xlu0 %v938, 15
      %v954 = vpop.permute.xlu0 %953
      %v955 = vsel %vm349, %v952, %v954
      %v956 = vsel %vm349, %v954, %v952
      %957 = vrot.lane.b32.xlu0 %v937, 1
      %v958 = vpop.permute.xlu0 %957
      %959 = vrot.lane.b32.xlu0 %v938, 1
      %v960 = vpop.permute.xlu0 %959
      %v961 = vsel %vm356, %v958, %v960
      %v962 = vsel %vm356, %v960, %v958
      %963 = vrot.lane.b32.xlu0 %v937, 127
      %v964 = vpop.permute.xlu0 %963
      %965 = vrot.lane.b32.xlu0 %v938, 127
      %v966 = vpop.permute.xlu0 %965
      %v967 = vsel %vm363, %v964, %v966
      %v968 = vsel %vm363, %v966, %v964
      %969 = vrot.lane.b32.xlu0 %v937, 113
      %v970 = vpop.permute.xlu0 %969
      %971 = vrot.lane.b32.xlu0 %v938, 113
      %v972 = vpop.permute.xlu0 %971
      %v973 = vsel %vm370, %v970, %v972
      %v974 = vsel %vm370, %v972, %v970
      %975 = vrot.lane.b32.xlu0 %v937, 112
      %v976 = vpop.permute.xlu0 %975
      %977 = vrot.lane.b32.xlu0 %v938, 112
      %v978 = vpop.permute.xlu0 %977
      %v979 = vsel %vm377, %v976, %v978
      %v980 = vsel %vm377, %v978, %v976
      %981 = vrot.lane.b32.xlu0 %v937, 111
      %v982 = vpop.permute.xlu0 %981
      %983 = vrot.lane.b32.xlu0 %v938, 111
      %v984 = vpop.permute.xlu0 %983
      %v985 = vsel %vm384, %v982, %v984
      %v986 = vsel %vm384, %v984, %v982
      %v987 = vmul.f32 %v944, %v287
      %v988 = vmul.f32 %v943, %v288
      %v989 = vmul.f32 %v950, %v289
      %v990 = vmul.f32 %v949, %v290
      %v991 = vmul.f32 %v956, %v291
      %v992 = vmul.f32 %v955, %v292
      %v993 = vmul.f32 %v962, %v293
      %v994 = vmul.f32 %v961, %v294
      %v995 = vmul.f32 %v937, %v295
      %v996 = vmul.f32 %v938, %v296
      %v997 = vmul.f32 %v967, %v297
      %v998 = vmul.f32 %v968, %v298
      %v999 = vmul.f32 %v973, %v299
      %v1000 = vmul.f32 %v974, %v300
      %v1001 = vmul.f32 %v979, %v301
      %v1002 = vmul.f32 %v980, %v302
      %v1003 = vmul.f32 %v985, %v303
      %v1004 = vmul.f32 %v986, %v304
      %1005 = vmatprep.subr.mxu0 %v988
      %1006 = vmatpush1.msra.mxu0 %v987
      %1007 = vmatprep.subr.mxu0 %v990
      %1008 = vmatpush1.msra.mxu0 %v989
      %1009 = vmatprep.subr.mxu0 %v992
      %1010 = vmatpush1.msra.mxu0 %v991
      %1011 = vmatprep.subr.mxu0 %v994
      %1012 = vmatpush1.msra.mxu0 %v993
      %1013 = vmatprep.subr.mxu0 %v996
      %1014 = vmatpush1.msra.mxu0 %v995
      %1015 = vmatprep.subr.mxu0 %v998
      %1016 = vmatpush1.msra.mxu0 %v997
      %1017 = vmatprep.subr.mxu0 %v1000
      %1018 = vmatpush1.msra.mxu0 %v999
      %1019 = vmatprep.subr.mxu0 %v1002
      %1020 = vmatpush1.msra.mxu0 %v1001
      %1021 = vmatprep.subr.mxu0 %v1004
      %1022 = vmatpush1.msra.mxu0 %v1003
      %1023 = vmatprep.subr.mxu0 0.0
      %1024 = vmatpush1.msra.mxu0 0.0
      %1025 = vmatprep.subr.mxu0 0.0
      %1026 = vmatpush1.msra.mxu0 0.0
      %1027 = vmatprep.subr.mxu0 0.0
      %1028 = vmatpush1.msra.mxu0 0.0
      %1029 = vmatprep.subr.mxu0 0.0
      %1030 = vmatpush1.msra.mxu0 0.0
      %1031 = vmatprep.subr.mxu0 0.0
      %1032 = vmatpush1.msra.mxu0 0.0
      %1033 = vmatprep.subr.mxu0 0.0
      %1034 = vmatpush1.msra.mxu0 0.0
      %1035 = vmatprep.subr.mxu0 0.0
      %1036 = vmatpush1.msra.mxu0 0.0
      %1037 = vmatprep.subr.mxu0 0.0
      %1038 = vmatpush1.msra.mxu0 0.0
      %1039 = vmatprep.subr.mxu0 0.0
      %1040 = vmatpush1.msra.mxu0 0.0
      %1041 = vmatprep.subr.mxu0 0.0
      %1042 = vmatpush1.msra.mxu0 0.0
      %1043 = vmatprep.subr.mxu0 0.0
      %1044 = vmatpush1.msra.mxu0 0.0
      %1045 = vmatprep.subr.mxu0 0.0
      %1046 = vmatpush1.msra.mxu0 0.0
      %1047 = vmatprep.subr.mxu0 0.0
      %1048 = vmatpush1.msra.mxu0 0.0
      %1049 = vmatprep.subr.mxu0 0.0
      %1050 = vmatpush1.msra.mxu0 0.0
      %1051 = vmatprep.subr.mxu0 0.0
      %1052 = vmatpush1.msra.mxu0 0.0
      %1053 = vmatprep.subr.mxu0 0.0
      %1054 = vmatpush1.msra.mxu0 0.0
      %1055 = vmatprep.subr.mxu0 0.0
      %1056 = vmatpush1.msra.mxu0 0.0
      %1057 = vmatprep.subr.mxu0 0.0
      %1058 = vmatpush1.msra.mxu0 0.0
      %1059 = vmatprep.subr.mxu0 0.0
      %1060 = vmatpush1.msra.mxu0 0.0
      %1061 = vmatprep.subr.mxu0 0.0
      %1062 = vmatpush1.msra.mxu0 0.0
      %1063 = vmatprep.subr.mxu0 0.0
      %1064 = vmatpush1.msra.mxu0 0.0
      %1065 = vmatprep.subr.mxu0 0.0
      %1066 = vmatpush1.msra.mxu0 0.0
      %1067 = vmatprep.subr.mxu0 0.0
      %1068 = vmatpush1.msra.mxu0 0.0
      %1069 = vmatprep.mubr.f32.mxu0 0.0
      %1070 = vmatmul.mubr.f32.gmra.mrb[0].mxu0 %v412
      %v1071 = vpop.f32.mrb[0].mxu0
      %v1072 = vadd.f32 %v408, %v1071
      %v1073 = vpop.f32.mrb[0].mxu0
      %v1074 = vadd.f32 %v408, %v1073
      %1075 = vdwg.mxu0
      %vm1076 = vcmp.ge.f32.partialorder %v1072, 0.0
      %vm1077 = vcmp.ge.f32.partialorder %v1074, 0.0
      %v1078 = vmul.f32 %v1072, 0.1
      %v1079 = vmul.f32 %v1074, 0.1
      %v1080 = vsel %vm1076, %v1072, %v1078
      %v1081 = vsel %vm1077, %v1074, %v1079
      %1082 = vrot.lane.b32.xlu0 %v1080, 17
      %v1083 = vpop.permute.xlu0 %1082
      %1084 = vrot.lane.b32.xlu0 %v1081, 17
      %v1085 = vpop.permute.xlu0 %1084
      %v1086 = vsel %vm335, %v1083, %v1085
      %v1087 = vsel %vm335, %v1085, %v1083
      %1088 = vrot.lane.b32.xlu0 %v1080, 16
      %v1089 = vpop.permute.xlu0 %1088
      %1090 = vrot.lane.b32.xlu0 %v1081, 16
      %v1091 = vpop.permute.xlu0 %1090
      %v1092 = vsel %vm342, %v1089, %v1091
      %v1093 = vsel %vm342, %v1091, %v1089
      %1094 = vrot.lane.b32.xlu0 %v1080, 15
      %v1095 = vpop.permute.xlu0 %1094
      %1096 = vrot.lane.b32.xlu0 %v1081, 15
      %v1097 = vpop.permute.xlu0 %1096
      %v1098 = vsel %vm349, %v1095, %v1097
      %v1099 = vsel %vm349, %v1097, %v1095
      %1100 = vrot.lane.b32.xlu0 %v1080, 1
      %v1101 = vpop.permute.xlu0 %1100
      %1102 = vrot.lane.b32.xlu0 %v1081, 1
      %v1103 = vpop.permute.xlu0 %1102
      %v1104 = vsel %vm356, %v1101, %v1103
      %v1105 = vsel %vm356, %v1103, %v1101
      %1106 = vrot.lane.b32.xlu0 %v1080, 127
      %v1107 = vpop.permute.xlu0 %1106
      %1108 = vrot.lane.b32.xlu0 %v1081, 127
      %v1109 = vpop.permute.xlu0 %1108
      %v1110 = vsel %vm363, %v1107, %v1109
      %v1111 = vsel %vm363, %v1109, %v1107
      %1112 = vrot.lane.b32.xlu0 %v1080, 113
      %v1113 = vpop.permute.xlu0 %1112
      %1114 = vrot.lane.b32.xlu0 %v1081, 113
      %v1115 = vpop.permute.xlu0 %1114
      %v1116 = vsel %vm370, %v1113, %v1115
      %v1117 = vsel %vm370, %v1115, %v1113
      %1118 = vrot.lane.b32.xlu0 %v1080, 112
      %v1119 = vpop.permute.xlu0 %1118
      %1120 = vrot.lane.b32.xlu0 %v1081, 112
      %v1121 = vpop.permute.xlu0 %1120
      %v1122 = vsel %vm377, %v1119, %v1121
      %v1123 = vsel %vm377, %v1121, %v1119
      %1124 = vrot.lane.b32.xlu0 %v1080, 111
      %v1125 = vpop.permute.xlu0 %1124
      %1126 = vrot.lane.b32.xlu0 %v1081, 111
      %v1127 = vpop.permute.xlu0 %1126
      %v1128 = vsel %vm384, %v1125, %v1127
      %v1129 = vsel %vm384, %v1127, %v1125
      %v1130 = vmul.f32 %v1087, %v307
      %v1131 = vmul.f32 %v1086, %v308
      %v1132 = vmul.f32 %v1093, %v309
      %v1133 = vmul.f32 %v1092, %v310
      %v1134 = vmul.f32 %v1099, %v311
      %v1135 = vmul.f32 %v1098, %v312
      %v1136 = vmul.f32 %v1105, %v313
      %v1137 = vmul.f32 %v1104, %v314
      %v1138 = vmul.f32 %v1080, %v315
      %v1139 = vmul.f32 %v1081, %v316
      %v1140 = vmul.f32 %v1110, %v317
      %v1141 = vmul.f32 %v1111, %v318
      %v1142 = vmul.f32 %v1116, %v319
      %v1143 = vmul.f32 %v1117, %v320
      %v1144 = vmul.f32 %v1122, %v321
      %v1145 = vmul.f32 %v1123, %v322
      %v1146 = vmul.f32 %v1128, %v323
      %v1147 = vmul.f32 %v1129, %v324
      %1148 = vmatprep.subr.mxu0 %v1131
      %1149 = vmatpush1.msra.mxu0 %v1130
      %1150 = vmatprep.subr.mxu0 %v1133
      %1151 = vmatpush1.msra.mxu0 %v1132
      %1152 = vmatprep.subr.mxu0 %v1135
      %1153 = vmatpush1.msra.mxu0 %v1134
      %1154 = vmatprep.subr.mxu0 %v1137
      %1155 = vmatpush1.msra.mxu0 %v1136
      %1156 = vmatprep.subr.mxu0 %v1139
      %1157 = vmatpush1.msra.mxu0 %v1138
      %1158 = vmatprep.subr.mxu0 %v1141
      %1159 = vmatpush1.msra.mxu0 %v1140
      %1160 = vmatprep.subr.mxu0 %v1143
      %1161 = vmatpush1.msra.mxu0 %v1142
      %1162 = vmatprep.subr.mxu0 %v1145
      %1163 = vmatpush1.msra.mxu0 %v1144
      %1164 = vmatprep.subr.mxu0 %v1147
      %1165 = vmatpush1.msra.mxu0 %v1146
      %1166 = vmatprep.subr.mxu0 0.0
      %1167 = vmatpush1.msra.mxu0 0.0
      %1168 = vmatprep.subr.mxu0 0.0
      %1169 = vmatpush1.msra.mxu0 0.0
      %1170 = vmatprep.subr.mxu0 0.0
      %1171 = vmatpush1.msra.mxu0 0.0
      %1172 = vmatprep.subr.mxu0 0.0
      %1173 = vmatpush1.msra.mxu0 0.0
      %1174 = vmatprep.subr.mxu0 0.0
      %1175 = vmatpush1.msra.mxu0 0.0
      %1176 = vmatprep.subr.mxu0 0.0
      %1177 = vmatpush1.msra.mxu0 0.0
      %1178 = vmatprep.subr.mxu0 0.0
      %1179 = vmatpush1.msra.mxu0 0.0
      %1180 = vmatprep.subr.mxu0 0.0
      %1181 = vmatpush1.msra.mxu0 0.0
      %1182 = vmatprep.subr.mxu0 0.0
      %1183 = vmatpush1.msra.mxu0 0.0
      %1184 = vmatprep.subr.mxu0 0.0
      %1185 = vmatpush1.msra.mxu0 0.0
      %1186 = vmatprep.subr.mxu0 0.0
      %1187 = vmatpush1.msra.mxu0 0.0
      %1188 = vmatprep.subr.mxu0 0.0
      %1189 = vmatpush1.msra.mxu0 0.0
      %1190 = vmatprep.subr.mxu0 0.0
      %1191 = vmatpush1.msra.mxu0 0.0
      %1192 = vmatprep.subr.mxu0 0.0
      %1193 = vmatpush1.msra.mxu0 0.0
      %1194 = vmatprep.subr.mxu0 0.0
      %1195 = vmatpush1.msra.mxu0 0.0
      %1196 = vmatprep.subr.mxu0 0.0
      %1197 = vmatpush1.msra.mxu0 0.0
      %1198 = vmatprep.subr.mxu0 0.0
      %1199 = vmatpush1.msra.mxu0 0.0
      %1200 = vmatprep.subr.mxu0 0.0
      %1201 = vmatpush1.msra.mxu0 0.0
      %1202 = vmatprep.subr.mxu0 0.0
      %1203 = vmatpush1.msra.mxu0 0.0
      %1204 = vmatprep.subr.mxu0 0.0
      %1205 = vmatpush1.msra.mxu0 0.0
      %1206 = vmatprep.subr.mxu0 0.0
      %1207 = vmatpush1.msra.mxu0 0.0
      %1208 = vmatprep.subr.mxu0 0.0
      %1209 = vmatpush1.msra.mxu0 0.0
      %1210 = vmatprep.subr.mxu0 0.0
      %1211 = vmatpush1.msra.mxu0 0.0
      %1212 = vmatprep.mubr.f32.mxu0 0.0
      %1213 = vmatmul.mubr.f32.gmra.mrb[0].mxu0 %v563
      %v1214 = vpop.f32.mrb[0].mxu0
      %v1215 = vadd.f32 %v560, %v1214
      %v1216 = vpop.f32.mrb[0].mxu0
      %v1217 = vadd.f32 %v560, %v1216
      %1218 = vdwg.mxu0
      %vm1219 = vcmp.ge.f32.partialorder %v1215, 0.0
      %vm1220 = vcmp.ge.f32.partialorder %v1217, 0.0
      %v1221 = vmul.f32 %v1215, 0.1
      %v1222 = vmul.f32 %v1217, 0.1
      %v1223 = vsel %vm1219, %v1215, %v1221
      %v1224 = vsel %vm1220, %v1217, %v1222
      %s1225 = scalar_lea.vmem %s285, 32
      %1226 = vst [vmem:[%s1225] sm:$0xff] %v1223
      %1227 = vst [vmem:[%s1225 + $0x8] sm:$0xff] %v1224
      %s1228 = scalar_lea.vmem %s278, 48
      %v1229 = vld [vmem:[%s1228] sm:$0xff]
      %v1230 = vld [vmem:[%s1228 + $0x8] sm:$0xff]
      %1231 = vrot.lane.b32.xlu0 %v1229, 17
      %v1232 = vpop.permute.xlu0 %1231
      %1233 = vrot.lane.b32.xlu0 %v1230, 17
      %v1234 = vpop.permute.xlu0 %1233
      %v1235 = vsel %vm335, %v1232, %v1234
      %v1236 = vsel %vm335, %v1234, %v1232
      %1237 = vrot.lane.b32.xlu0 %v1229, 16
      %v1238 = vpop.permute.xlu0 %1237
      %1239 = vrot.lane.b32.xlu0 %v1230, 16
      %v1240 = vpop.permute.xlu0 %1239
      %v1241 = vsel %vm342, %v1238, %v1240
      %v1242 = vsel %vm342, %v1240, %v1238
      %1243 = vrot.lane.b32.xlu0 %v1229, 15
      %v1244 = vpop.permute.xlu0 %1243
      %1245 = vrot.lane.b32.xlu0 %v1230, 15
      %v1246 = vpop.permute.xlu0 %1245
      %v1247 = vsel %vm349, %v1244, %v1246
      %v1248 = vsel %vm349, %v1246, %v1244
      %1249 = vrot.lane.b32.xlu0 %v1229, 1
      %v1250 = vpop.permute.xlu0 %1249
      %1251 = vrot.lane.b32.xlu0 %v1230, 1
      %v1252 = vpop.permute.xlu0 %1251
      %v1253 = vsel %vm356, %v1250, %v1252
      %v1254 = vsel %vm356, %v1252, %v1250
      %1255 = vrot.lane.b32.xlu0 %v1229, 127
      %v1256 = vpop.permute.xlu0 %1255
      %1257 = vrot.lane.b32.xlu0 %v1230, 127
      %v1258 = vpop.permute.xlu0 %1257
      %v1259 = vsel %vm363, %v1256, %v1258
      %v1260 = vsel %vm363, %v1258, %v1256
      %1261 = vrot.lane.b32.xlu0 %v1229, 113
      %v1262 = vpop.permute.xlu0 %1261
      %1263 = vrot.lane.b32.xlu0 %v1230, 113
      %v1264 = vpop.permute.xlu0 %1263
      %v1265 = vsel %vm370, %v1262, %v1264
      %v1266 = vsel %vm370, %v1264, %v1262
      %1267 = vrot.lane.b32.xlu0 %v1229, 112
      %v1268 = vpop.permute.xlu0 %1267
      %1269 = vrot.lane.b32.xlu0 %v1230, 112
      %v1270 = vpop.permute.xlu0 %1269
      %v1271 = vsel %vm377, %v1268, %v1270
      %v1272 = vsel %vm377, %v1270, %v1268
      %1273 = vrot.lane.b32.xlu0 %v1229, 111
      %v1274 = vpop.permute.xlu0 %1273
      %1275 = vrot.lane.b32.xlu0 %v1230, 111
      %v1276 = vpop.permute.xlu0 %1275
      %v1277 = vsel %vm384, %v1274, %v1276
      %v1278 = vsel %vm384, %v1276, %v1274
      %v1279 = vmul.f32 %v1236, %v287
      %v1280 = vmul.f32 %v1235, %v288
      %v1281 = vmul.f32 %v1242, %v289
      %v1282 = vmul.f32 %v1241, %v290
      %v1283 = vmul.f32 %v1248, %v291
      %v1284 = vmul.f32 %v1247, %v292
      %v1285 = vmul.f32 %v1254, %v293
      %v1286 = vmul.f32 %v1253, %v294
      %v1287 = vmul.f32 %v1229, %v295
      %v1288 = vmul.f32 %v1230, %v296
      %v1289 = vmul.f32 %v1259, %v297
      %v1290 = vmul.f32 %v1260, %v298
      %v1291 = vmul.f32 %v1265, %v299
      %v1292 = vmul.f32 %v1266, %v300
      %v1293 = vmul.f32 %v1271, %v301
      %v1294 = vmul.f32 %v1272, %v302
      %v1295 = vmul.f32 %v1277, %v303
      %v1296 = vmul.f32 %v1278, %v304
      %1297 = vmatprep.subr.mxu0 %v1280
      %1298 = vmatpush1.msra.mxu0 %v1279
      %1299 = vmatprep.subr.mxu0 %v1282
      %1300 = vmatpush1.msra.mxu0 %v1281
      %1301 = vmatprep.subr.mxu0 %v1284
      %1302 = vmatpush1.msra.mxu0 %v1283
      %1303 = vmatprep.subr.mxu0 %v1286
      %1304 = vmatpush1.msra.mxu0 %v1285
      %1305 = vmatprep.subr.mxu0 %v1288
      %1306 = vmatpush1.msra.mxu0 %v1287
      %1307 = vmatprep.subr.mxu0 %v1290
      %1308 = vmatpush1.msra.mxu0 %v1289
      %1309 = vmatprep.subr.mxu0 %v1292
      %1310 = vmatpush1.msra.mxu0 %v1291
      %1311 = vmatprep.subr.mxu0 %v1294
      %1312 = vmatpush1.msra.mxu0 %v1293
      %1313 = vmatprep.subr.mxu0 %v1296
      %1314 = vmatpush1.msra.mxu0 %v1295
      %1315 = vmatprep.subr.mxu0 0.0
      %1316 = vmatpush1.msra.mxu0 0.0
      %1317 = vmatprep.subr.mxu0 0.0
      %1318 = vmatpush1.msra.mxu0 0.0
      %1319 = vmatprep.subr.mxu0 0.0
      %1320 = vmatpush1.msra.mxu0 0.0
      %1321 = vmatprep.subr.mxu0 0.0
      %1322 = vmatpush1.msra.mxu0 0.0
      %1323 = vmatprep.subr.mxu0 0.0
      %1324 = vmatpush1.msra.mxu0 0.0
      %1325 = vmatprep.subr.mxu0 0.0
      %1326 = vmatpush1.msra.mxu0 0.0
      %1327 = vmatprep.subr.mxu0 0.0
      %1328 = vmatpush1.msra.mxu0 0.0
      %1329 = vmatprep.subr.mxu0 0.0
      %1330 = vmatpush1.msra.mxu0 0.0
      %1331 = vmatprep.subr.mxu0 0.0
      %1332 = vmatpush1.msra.mxu0 0.0
      %1333 = vmatprep.subr.mxu0 0.0
      %1334 = vmatpush1.msra.mxu0 0.0
      %1335 = vmatprep.subr.mxu0 0.0
      %1336 = vmatpush1.msra.mxu0 0.0
      %1337 = vmatprep.subr.mxu0 0.0
      %1338 = vmatpush1.msra.mxu0 0.0
      %1339 = vmatprep.subr.mxu0 0.0
      %1340 = vmatpush1.msra.mxu0 0.0
      %1341 = vmatprep.subr.mxu0 0.0
      %1342 = vmatpush1.msra.mxu0 0.0
      %1343 = vmatprep.subr.mxu0 0.0
      %1344 = vmatpush1.msra.mxu0 0.0
      %1345 = vmatprep.subr.mxu0 0.0
      %1346 = vmatpush1.msra.mxu0 0.0
      %1347 = vmatprep.subr.mxu0 0.0
      %1348 = vmatpush1.msra.mxu0 0.0
      %1349 = vmatprep.subr.mxu0 0.0
      %1350 = vmatpush1.msra.mxu0 0.0
      %1351 = vmatprep.subr.mxu0 0.0
      %1352 = vmatpush1.msra.mxu0 0.0
      %1353 = vmatprep.subr.mxu0 0.0
      %1354 = vmatpush1.msra.mxu0 0.0
      %1355 = vmatprep.subr.mxu0 0.0
      %1356 = vmatpush1.msra.mxu0 0.0
      %1357 = vmatprep.subr.mxu0 0.0
      %1358 = vmatpush1.msra.mxu0 0.0
      %1359 = vmatprep.subr.mxu0 0.0
      %1360 = vmatpush1.msra.mxu0 0.0
      %1361 = vmatprep.mubr.f32.mxu0 0.0
      %1362 = vmatmul.mubr.f32.gmra.mrb[0].mxu0 %v412
      %v1363 = vpop.f32.mrb[0].mxu0
      %v1364 = vadd.f32 %v408, %v1363
      %v1365 = vpop.f32.mrb[0].mxu0
      %v1366 = vadd.f32 %v408, %v1365
      %1367 = vdwg.mxu0
      %vm1368 = vcmp.ge.f32.partialorder %v1364, 0.0
      %vm1369 = vcmp.ge.f32.partialorder %v1366, 0.0
      %v1370 = vmul.f32 %v1364, 0.1
      %v1371 = vmul.f32 %v1366, 0.1
      %v1372 = vsel %vm1368, %v1364, %v1370
      %v1373 = vsel %vm1369, %v1366, %v1371
      %1374 = vrot.lane.b32.xlu0 %v1372, 17
      %v1375 = vpop.permute.xlu0 %1374
      %1376 = vrot.lane.b32.xlu0 %v1373, 17
      %v1377 = vpop.permute.xlu0 %1376
      %v1378 = vsel %vm335, %v1375, %v1377
      %v1379 = vsel %vm335, %v1377, %v1375
      %1380 = vrot.lane.b32.xlu0 %v1372, 16
      %v1381 = vpop.permute.xlu0 %1380
      %1382 = vrot.lane.b32.xlu0 %v1373, 16
      %v1383 = vpop.permute.xlu0 %1382
      %v1384 = vsel %vm342, %v1381, %v1383
      %v1385 = vsel %vm342, %v1383, %v1381
      %1386 = vrot.lane.b32.xlu0 %v1372, 15
      %v1387 = vpop.permute.xlu0 %1386
      %1388 = vrot.lane.b32.xlu0 %v1373, 15
      %v1389 = vpop.permute.xlu0 %1388
      %v1390 = vsel %vm349, %v1387, %v1389
      %v1391 = vsel %vm349, %v1389, %v1387
      %1392 = vrot.lane.b32.xlu0 %v1372, 1
      %v1393 = vpop.permute.xlu0 %1392
      %1394 = vrot.lane.b32.xlu0 %v1373, 1
      %v1395 = vpop.permute.xlu0 %1394
      %v1396 = vsel %vm356, %v1393, %v1395
      %v1397 = vsel %vm356, %v1395, %v1393
      %1398 = vrot.lane.b32.xlu0 %v1372, 127
      %v1399 = vpop.permute.xlu0 %1398
      %1400 = vrot.lane.b32.xlu0 %v1373, 127
      %v1401 = vpop.permute.xlu0 %1400
      %v1402 = vsel %vm363, %v1399, %v1401
      %v1403 = vsel %vm363, %v1401, %v1399
      %1404 = vrot.lane.b32.xlu0 %v1372, 113
      %v1405 = vpop.permute.xlu0 %1404
      %1406 = vrot.lane.b32.xlu0 %v1373, 113
      %v1407 = vpop.permute.xlu0 %1406
      %v1408 = vsel %vm370, %v1405, %v1407
      %v1409 = vsel %vm370, %v1407, %v1405
      %1410 = vrot.lane.b32.xlu0 %v1372, 112
      %v1411 = vpop.permute.xlu0 %1410
      %1412 = vrot.lane.b32.xlu0 %v1373, 112
      %v1413 = vpop.permute.xlu0 %1412
      %v1414 = vsel %vm377, %v1411, %v1413
      %v1415 = vsel %vm377, %v1413, %v1411
      %1416 = vrot.lane.b32.xlu0 %v1372, 111
      %v1417 = vpop.permute.xlu0 %1416
      %1418 = vrot.lane.b32.xlu0 %v1373, 111
      %v1419 = vpop.permute.xlu0 %1418
      %v1420 = vsel %vm384, %v1417, %v1419
      %v1421 = vsel %vm384, %v1419, %v1417
      %v1422 = vmul.f32 %v1379, %v307
      %v1423 = vmul.f32 %v1378, %v308
      %v1424 = vmul.f32 %v1385, %v309
      %v1425 = vmul.f32 %v1384, %v310
      %v1426 = vmul.f32 %v1391, %v311
      %v1427 = vmul.f32 %v1390, %v312
      %v1428 = vmul.f32 %v1397, %v313
      %v1429 = vmul.f32 %v1396, %v314
      %v1430 = vmul.f32 %v1372, %v315
      %v1431 = vmul.f32 %v1373, %v316
      %v1432 = vmul.f32 %v1402, %v317
      %v1433 = vmul.f32 %v1403, %v318
      %v1434 = vmul.f32 %v1408, %v319
      %v1435 = vmul.f32 %v1409, %v320
      %v1436 = vmul.f32 %v1414, %v321
      %v1437 = vmul.f32 %v1415, %v322
      %v1438 = vmul.f32 %v1420, %v323
      %v1439 = vmul.f32 %v1421, %v324
      %1440 = vmatprep.subr.mxu0 %v1423
      %1441 = vmatpush1.msra.mxu0 %v1422
      %1442 = vmatprep.subr.mxu0 %v1425
      %1443 = vmatpush1.msra.mxu0 %v1424
      %1444 = vmatprep.subr.mxu0 %v1427
      %1445 = vmatpush1.msra.mxu0 %v1426
      %1446 = vmatprep.subr.mxu0 %v1429
      %1447 = vmatpush1.msra.mxu0 %v1428
      %1448 = vmatprep.subr.mxu0 %v1431
      %1449 = vmatpush1.msra.mxu0 %v1430
      %1450 = vmatprep.subr.mxu0 %v1433
      %1451 = vmatpush1.msra.mxu0 %v1432
      %1452 = vmatprep.subr.mxu0 %v1435
      %1453 = vmatpush1.msra.mxu0 %v1434
      %1454 = vmatprep.subr.mxu0 %v1437
      %1455 = vmatpush1.msra.mxu0 %v1436
      %1456 = vmatprep.subr.mxu0 %v1439
      %1457 = vmatpush1.msra.mxu0 %v1438
      %1458 = vmatprep.subr.mxu0 0.0
      %1459 = vmatpush1.msra.mxu0 0.0
      %1460 = vmatprep.subr.mxu0 0.0
      %1461 = vmatpush1.msra.mxu0 0.0
      %1462 = vmatprep.subr.mxu0 0.0
      %1463 = vmatpush1.msra.mxu0 0.0
      %1464 = vmatprep.subr.mxu0 0.0
      %1465 = vmatpush1.msra.mxu0 0.0
      %1466 = vmatprep.subr.mxu0 0.0
      %1467 = vmatpush1.msra.mxu0 0.0
      %1468 = vmatprep.subr.mxu0 0.0
      %1469 = vmatpush1.msra.mxu0 0.0
      %1470 = vmatprep.subr.mxu0 0.0
      %1471 = vmatpush1.msra.mxu0 0.0
      %1472 = vmatprep.subr.mxu0 0.0
      %1473 = vmatpush1.msra.mxu0 0.0
      %1474 = vmatprep.subr.mxu0 0.0
      %1475 = vmatpush1.msra.mxu0 0.0
      %1476 = vmatprep.subr.mxu0 0.0
      %1477 = vmatpush1.msra.mxu0 0.0
      %1478 = vmatprep.subr.mxu0 0.0
      %1479 = vmatpush1.msra.mxu0 0.0
      %1480 = vmatprep.subr.mxu0 0.0
      %1481 = vmatpush1.msra.mxu0 0.0
      %1482 = vmatprep.subr.mxu0 0.0
      %1483 = vmatpush1.msra.mxu0 0.0
      %1484 = vmatprep.subr.mxu0 0.0
      %1485 = vmatpush1.msra.mxu0 0.0
      %1486 = vmatprep.subr.mxu0 0.0
      %1487 = vmatpush1.msra.mxu0 0.0
      %1488 = vmatprep.subr.mxu0 0.0
      %1489 = vmatpush1.msra.mxu0 0.0
      %1490 = vmatprep.subr.mxu0 0.0
      %1491 = vmatpush1.msra.mxu0 0.0
      %1492 = vmatprep.subr.mxu0 0.0
      %1493 = vmatpush1.msra.mxu0 0.0
      %1494 = vmatprep.subr.mxu0 0.0
      %1495 = vmatpush1.msra.mxu0 0.0
      %1496 = vmatprep.subr.mxu0 0.0
      %1497 = vmatpush1.msra.mxu0 0.0
      %1498 = vmatprep.subr.mxu0 0.0
      %1499 = vmatpush1.msra.mxu0 0.0
      %1500 = vmatprep.subr.mxu0 0.0
      %1501 = vmatpush1.msra.mxu0 0.0
      %1502 = vmatprep.subr.mxu0 0.0
      %1503 = vmatpush1.msra.mxu0 0.0
      %1504 = vmatprep.mubr.f32.mxu0 0.0
      %1505 = vmatmul.mubr.f32.gmra.mrb[0].mxu0 %v563
      %v1506 = vpop.f32.mrb[0].mxu0
      %v1507 = vadd.f32 %v560, %v1506
      %v1508 = vpop.f32.mrb[0].mxu0
      %v1509 = vadd.f32 %v560, %v1508
      %1510 = vdwg.mxu0
      %vm1511 = vcmp.ge.f32.partialorder %v1507, 0.0
      %vm1512 = vcmp.ge.f32.partialorder %v1509, 0.0
      %v1513 = vmul.f32 %v1507, 0.1
      %v1514 = vmul.f32 %v1509, 0.1
      %v1515 = vsel %vm1511, %v1507, %v1513
      %v1516 = vsel %vm1512, %v1509, %v1514
      %s1517 = scalar_lea.vmem %s285, 48
      %1518 = vst [vmem:[%s1517] sm:$0xff] %v1515
      %1519 = vst [vmem:[%s1517 + $0x8] sm:$0xff] %v1516
      %s1520 = smul.u32 4, %s18
      %p1521 = scmp.lt.s32.totalorder %s1520, 7
      %s1522 = scalar_select %p1521, %s1520, 7
      %s1523 = smul.addr %s1522, 2
      %s1524 = smul.addr %s1523, 8
      %s1525 = scalar_lea.vmem %s7, %s1524
      // Predicated region
      $region49: #{conv_lr_forward.1} parent=47 // pred_check
        %p1526 = pneg %p188
      $region50: #{conv_lr_forward.1} parent=47 // pred_check_branch
        %1528 = sbr.rel (%p1526) target = $region52
      $region51: #{conv_lr_forward.1} parent=47 // pred_region
        %s1529 = smul.u32 4, %s18
      $region52: #{conv_lr_forward.1} parent=47 // pred_fallthru
        _
    $region48: #{conv_lr_forward.1} parent=5 // pred_fallthru
      _
    %p1530 = scmp.le.s32.totalorder 2, %s13
    // Predicated region
    $region53: #{conv_lr_forward.1} parent=5 // pred_check
      %p1531 = pneg %p1530
    $region54: #{conv_lr_forward.1} parent=5 // pred_check_branch
      %1533 = sbr.rel (%p1531) target = $region56
    $region55: #{conv_lr_forward.1} parent=5 // pred_region
      %s1534 = ssub.s32 %s13, 2
      // Predicated region
      $region57: #{conv_lr_forward.1} parent=55 // pred_check
        %p1535 = pneg %p194
      $region58: #{conv_lr_forward.1} parent=55 // pred_check_branch
        %1537 = sbr.rel (%p1535) target = $region60
      $region59: #{conv_lr_forward.1} parent=55 // pred_region
        %s1538 = smul.u32 4, %s19
        %p1539 = scmp.lt.s32.totalorder %s1538, 7
        %s1540 = scalar_select %p1539, %s1538, 7
        %s1541 = smul.addr %s1540, 2
        %s1542 = smul.addr %s1541, 8
        %s1543 = scalar_lea.vmem %s7, %s1542
      $region60: #{conv_lr_forward.1} parent=55 // pred_fallthru
        _
    $region56: #{conv_lr_forward.1} parent=5 // pred_fallthru
      _
  $region6: #{conv_lr_forward.1} parent=0 // loop_footer
    %s17 = sadd.s32 1, %s13
  $region7: #{conv_lr_forward.1} parent=0 // loop_footer_branch
    %12 = sbr.rel target = $region3
  $region8: #{conv_lr_forward.1} parent=0 // loop_exit
    _

</llo_original>
